<compile_context>
chip_gen: v6e
topology: v6e:2x2x1
jax: 0.10.0
libtpu: 0.0.40
codegen_flags: <defaults>
</compile_context>

<pallas_src>
import math
import jax
import jax.numpy as jnp
from jax.experimental import pallas as pl
from jax.experimental.pallas import tpu as pltpu


def fusion_kernel(h_ref, d_ref, w1_ref, aux_ref, o_ref):
    h = h_ref[...]                      # (tm, D)  native dtype (e.g. f32)
    d = d_ref[...]                      # (tm, D)  native dtype
    w1 = w1_ref[...]                    # (D, D)   compute dtype (x @ W layout)
    b1 = aux_ref[0:1, :]                # (1, D)   f32
    w2 = aux_ref[1:2, :]                # (1, D)   f32
    # linear2's scalar bias b2 cancels under the 2-way stack softmax.

    cdt = w1.dtype                      # matmul (MXU) input dtype
    hm = h.astype(cdt)
    dm = d.astype(cdt)

    # linear1 + tanh, one dot per stack branch (W1 stays MXU-resident).
    th = jnp.tanh(jnp.dot(hm, w1, preferred_element_type=jnp.float32) + b1)
    td = jnp.tanh(jnp.dot(dm, w1, preferred_element_type=jnp.float32) + b1)

    # linear2 (out_features=1) as a lane reduction -> per-row scalar scores.
    sh = jnp.sum(th * w2, axis=-1, keepdims=True)                    # (tm, 1)
    sd = jnp.sum(td * w2, axis=-1, keepdims=True)                    # (tm, 1)

    # softmax over the 2-element stack dim == sigmoid(sh - sd), sign-stable:
    #   z = exp(-|diff|);  sigmoid(diff) = 1/(1+z) if diff>=0 else z/(1+z)
    diff = sh - sd
    z = jnp.exp(-jnp.abs(diff))
    approx = cdt != jnp.float32         # approx recip is plenty on the bf16 path
    inv = pl.reciprocal(1.0 + z, approx=approx)
    ah = jnp.where(diff >= 0, inv, z * inv)                          # weight(hidden)

    # Blend in f32 using the native-precision embeddings: ah*h + (1-ah)*d.
    hf = h.astype(jnp.float32)
    df = d.astype(jnp.float32)
    o_ref[...] = (df + ah * (hf - df)).astype(o_ref.dtype)


def fusion_forward(hidden, dy_emb, w1, b1, w2, b2, *, tm=2048,
                   compute_dtype=jnp.bfloat16, out_dtype=None):
    """Fusion.forward (eval semantics).

    w1 is stored pre-transposed (x @ W1 layout).  hidden / dy_emb are streamed
    in their native dtype; only the MXU operands are cast to compute_dtype
    inside the kernel.  Set out_dtype=compute_dtype if downstream tolerates a
    narrower output stream (halves writeback bytes).
    """
    N, D = hidden.shape
    out_dtype = hidden.dtype if out_dtype is None else out_dtype

    # Pack the small parameters into one (2, D) f32 operand (single DMA).
    aux = jnp.concatenate([
        jnp.asarray(b1, jnp.float32).reshape(1, D),
        jnp.asarray(w2, jnp.float32).reshape(1, D),
    ], axis=0)
    del b2  # scalar bias of linear2 cancels under the stack-dim softmax

    w1c = w1.astype(compute_dtype)      # tiny (D, D), loop-invariant operand

    # Row tiling: big tiles for the HBM roofline; no pad — Pallas clips the
    # partial last block (rows are independent, OOB tail garbage is harmless).
    if tm >= N:
        tm = N
    else:
        tm = max(8, (tm // 8) * 8)
    grid = pl.cdiv(N, tm)

    row_spec = pl.BlockSpec((tm, D), lambda i: (i, 0))
    out = pl.pallas_call(
        fusion_kernel,
        out_shape=jax.ShapeDtypeStruct((N, D), out_dtype),
        grid_spec=pltpu.PrefetchScalarGridSpec(
            num_scalar_prefetch=0,
            grid=(grid,),
            in_specs=[
                row_spec,                                  # hidden tile
                row_spec,                                  # dy_emb tile
                pl.BlockSpec((D, D), lambda i: (0, 0)),    # W1 (loop-invariant)
                pl.BlockSpec((2, D), lambda i: (0, 0)),    # [b1; w2]
            ],
            out_specs=row_spec,
        ),
        compiler_params=pltpu.CompilerParams(
            dimension_semantics=("parallel",)),
    )(hidden, dy_emb, w1c, aux)
    return out


def fusion_reference(hidden, dy_emb, w1, b1, w2, b2, *, compute_dtype=jnp.float32):
    """Pure-JAX reference.  compute_dtype mirrors the kernel's MXU-input cast;
    the blend is always done with the f32 embeddings, as in the kernel."""
    f32 = jnp.float32
    emb = jnp.stack([hidden, dy_emb], axis=0).astype(f32)            # (2, N, D)
    mm_in = emb.astype(compute_dtype)
    w1c = w1.astype(compute_dtype)
    with jax.default_matmul_precision("highest"):
        h1 = jnp.tanh(
            jnp.einsum("bnd,de->bne", mm_in, w1c,
                       preferred_element_type=f32)
            + b1.reshape(1, 1, -1).astype(f32))
        score = h1 @ w2.reshape(-1, 1).astype(f32) \
            + jnp.asarray(b2, f32).reshape(1, 1, 1)
        score = jax.nn.softmax(score, axis=0)
        return jnp.sum(score * emb, axis=0)


if __name__ == "__main__":
    key = jax.random.PRNGKey(0)
    # Lane-dense D (multiple of 128); N deliberately NOT a multiple of tm so
    # the cdiv / clipped-last-block path is exercised (no host pad).
    N, D = 1000, 128
    k_h, k_d, k_w1, k_w2, k_b1, k_b2 = jax.random.split(key, 6)

    hidden = jax.random.normal(k_h, (N, D), dtype=jnp.float32)
    dy_emb = jax.random.normal(k_d, (N, D), dtype=jnp.float32)

    # xavier_normal_ weights (as in Fusion.init_weights); small random biases.
    std1 = math.sqrt(2.0 / (D + D))
    std2 = math.sqrt(2.0 / (D + 1))
    w1 = jax.random.normal(k_w1, (D, D), dtype=jnp.float32) * std1   # x @ W1 layout
    w2 = jax.random.normal(k_w2, (1, D), dtype=jnp.float32) * std2
    b1 = jax.random.normal(k_b1, (1, D), dtype=jnp.float32) * 0.1
    b2 = jax.random.normal(k_b2, (1, 1), dtype=jnp.float32) * 0.1

    # Demo uses tm=256 so this small N still gives 4 grid steps; for real
    # workloads keep the tm=2048 default (sweep up to 4096 on v7x).
    # 1) Exact-precision path (f32 MXU inputs): faithful to the module math.
    out_f32 = jax.block_until_ready(
        fusion_forward(hidden, dy_emb, w1, b1, w2, b2,
                       tm=256, compute_dtype=jnp.float32))
    ref_f32 = fusion_reference(hidden, dy_emb, w1, b1, w2, b2)
    assert out_f32.shape == (N, D)
    assert jnp.allclose(out_f32, ref_f32, atol=5e-4, rtol=5e-4), "f32 mismatch"

    # 2) Fast path (bf16 MXU inputs cast in-kernel, f32 accumulation + blend),
    #    compared against a matched-precision reference.
    out_bf16 = jax.block_until_ready(
        fusion_forward(hidden, dy_emb, w1, b1, w2, b2,
                       tm=256, compute_dtype=jnp.bfloat16))
    ref_bf16 = fusion_reference(hidden, dy_emb, w1, b1, w2, b2,
                                compute_dtype=jnp.bfloat16)
    assert out_bf16.shape == (N, D)
    assert jnp.allclose(out_bf16, ref_bf16, atol=2e-2, rtol=2e-2), "bf16 mismatch"

    print("KERNEL_OK")
</pallas_src>

<mosaic_0001>
module attributes {stable_mosaic.version = 11 : i64} {
  func.func @fusion_kernel(%arg0: i32, %arg1: memref<256x128xf32, #tpu.memory_space<vmem>>, %arg2: memref<256x128xf32, #tpu.memory_space<vmem>>, %arg3: memref<128x128xf32, #tpu.memory_space<vmem>>, %arg4: memref<2x128xf32, #tpu.memory_space<vmem>>, %arg5: memref<256x128xf32, #tpu.memory_space<vmem>>) attributes {dimension_semantics = [#tpu.dimension_semantics<parallel>], iteration_bounds = array<i64: 4>, scalar_prefetch = 0 : i64, scratch_operands = 0 : i64, tpu.core_type = #tpu.core_type<tc>, window_params = [{transform_indices = @transform_0, window_bounds = array<i64: 256, 128>}, {transform_indices = @transform_1, window_bounds = array<i64: 256, 128>}, {pipeline_mode = #tpu.pipeline_mode<synchronous>, transform_indices = @transform_2, window_bounds = array<i64: 128, 128>}, {pipeline_mode = #tpu.pipeline_mode<synchronous>, transform_indices = @transform_3, window_bounds = array<i64: 2, 128>}, {transform_indices = @transform_4, window_bounds = array<i64: 256, 128>}]} {
    %c0 = arith.constant 0 : index
    %c0_0 = arith.constant 0 : index
    %0 = vector.load %arg1[%c0, %c0_0] : memref<256x128xf32, #tpu.memory_space<vmem>>, vector<256x128xf32>
    %c0_1 = arith.constant 0 : index
    %c0_2 = arith.constant 0 : index
    %1 = vector.load %arg2[%c0_1, %c0_2] : memref<256x128xf32, #tpu.memory_space<vmem>>, vector<256x128xf32>
    %c0_3 = arith.constant 0 : index
    %c0_4 = arith.constant 0 : index
    %2 = vector.load %arg3[%c0_3, %c0_4] : memref<128x128xf32, #tpu.memory_space<vmem>>, vector<128x128xf32>
    %c0_5 = arith.constant 0 : index
    %c0_6 = arith.constant 0 : index
    %3 = vector.load %arg4[%c0_5, %c0_6] : memref<2x128xf32, #tpu.memory_space<vmem>>, vector<1x128xf32>
    %c1 = arith.constant 1 : index
    %c0_7 = arith.constant 0 : index
    %4 = vector.load %arg4[%c1, %c0_7] : memref<2x128xf32, #tpu.memory_space<vmem>>, vector<1x128xf32>
    %cst = arith.constant dense<0.000000e+00> : vector<256x128xf32>
    %5 = tpu.matmul %0, %2, %cst {dimension_numbers = #tpu.dot_dimension_numbers<[1], [0], [0], [1], [0, 0, 1, 1], [], []>} : vector<256x128xf32>, vector<128x128xf32>, vector<256x128xf32> -> vector<256x128xf32>
    %6 = vector.broadcast %3 : vector<1x128xf32> to vector<256x128xf32>
    %7 = arith.addf %5, %6 : vector<256x128xf32>
    %8 = math.tanh %7 : vector<256x128xf32>
    %cst_8 = arith.constant dense<0.000000e+00> : vector<256x128xf32>
    %9 = tpu.matmul %1, %2, %cst_8 {dimension_numbers = #tpu.dot_dimension_numbers<[1], [0], [0], [1], [0, 0, 1, 1], [], []>} : vector<256x128xf32>, vector<128x128xf32>, vector<256x128xf32> -> vector<256x128xf32>
    %10 = vector.broadcast %3 : vector<1x128xf32> to vector<256x128xf32>
    %11 = arith.addf %9, %10 : vector<256x128xf32>
    %12 = math.tanh %11 : vector<256x128xf32>
    %13 = vector.broadcast %4 : vector<1x128xf32> to vector<256x128xf32>
    %14 = arith.mulf %8, %13 : vector<256x128xf32>
    %cst_9 = arith.constant dense<0.000000e+00> : vector<256xf32>
    %15 = vector.multi_reduction <add>, %14, %cst_9 [1] : vector<256x128xf32> to vector<256xf32>
    %16 = vector.shape_cast %15 : vector<256xf32> to vector<256x1xf32>
    %17 = vector.broadcast %4 : vector<1x128xf32> to vector<256x128xf32>
    %18 = arith.mulf %12, %17 : vector<256x128xf32>
    %cst_10 = arith.constant dense<0.000000e+00> : vector<256xf32>
    %19 = vector.multi_reduction <add>, %18, %cst_10 [1] : vector<256x128xf32> to vector<256xf32>
    %20 = vector.shape_cast %19 : vector<256xf32> to vector<256x1xf32>
    %21 = arith.subf %16, %20 : vector<256x1xf32>
    %22 = math.absf %21 : vector<256x1xf32>
    %cst_11 = arith.constant 0.000000e+00 : f32
    %23 = vector.broadcast %cst_11 : f32 to vector<256x1xf32>
    %24 = arith.subf %23, %22 : vector<256x1xf32>
    %25 = math.exp %24 : vector<256x1xf32>
    %cst_12 = arith.constant 1.000000e+00 : f32
    %26 = vector.broadcast %cst_12 : f32 to vector<256x1xf32>
    %27 = arith.addf %26, %25 : vector<256x1xf32>
    %28 = tpu.reciprocal %27 : vector<256x1xf32> -> vector<256x1xf32>
    %cst_13 = arith.constant 0.000000e+00 : f32
    %29 = vector.broadcast %cst_13 : f32 to vector<256x1xf32>
    %30 = arith.cmpf oge, %21, %29 : vector<256x1xf32>
    %31 = arith.mulf %25, %28 : vector<256x1xf32>
    %32 = arith.select %30, %28, %31 : vector<256x1xi1>, vector<256x1xf32>
    %33 = arith.subf %0, %1 : vector<256x128xf32>
    %34 = vector.broadcast %32 : vector<256x1xf32> to vector<256x128xf32>
    %35 = arith.mulf %34, %33 : vector<256x128xf32>
    %36 = arith.addf %1, %35 : vector<256x128xf32>
    %c0_14 = arith.constant 0 : index
    %c0_15 = arith.constant 0 : index
    %37 = vector.load %arg5[%c0_14, %c0_15] : memref<256x128xf32, #tpu.memory_space<vmem>>, vector<256x128xf32>
    tpu.vector_store %arg5[%c0_14, %c0_15], %36 {strides = array<i32>} : memref<256x128xf32, #tpu.memory_space<vmem>>, vector<256x128xf32>,
    return
  }
  func.func @transform_0(%arg0: i32) -> (i32, i32) {
    %c0_i32 = arith.constant 0 : i32
    %c0_i32_0 = arith.constant 0 : i32
    return %arg0, %c0_i32 : i32, i32
  }
  func.func @transform_1(%arg0: i32) -> (i32, i32) {
    %c0_i32 = arith.constant 0 : i32
    %c0_i32_0 = arith.constant 0 : i32
    return %arg0, %c0_i32 : i32, i32
  }
  func.func @transform_2(%arg0: i32) -> (i32, i32) {
    %c0_i32 = arith.constant 0 : i32
    %c0_i32_0 = arith.constant 0 : i32
    %c0_i32_1 = arith.constant 0 : i32
    return %c0_i32, %c0_i32_0 : i32, i32
  }
  func.func @transform_3(%arg0: i32) -> (i32, i32) {
    %c0_i32 = arith.constant 0 : i32
    %c0_i32_0 = arith.constant 0 : i32
    %c0_i32_1 = arith.constant 0 : i32
    return %c0_i32, %c0_i32_0 : i32, i32
  }
  func.func @transform_4(%arg0: i32) -> (i32, i32) {
    %c0_i32 = arith.constant 0 : i32
    %c0_i32_0 = arith.constant 0 : i32
    return %arg0, %c0_i32 : i32, i32
  }
}

</mosaic_0001>

<llo_original>
// kernel: tpu_custom_call.1
$region0: #{tpu_custom_call.1}
  #allocation0 [shape = 'u32[]', space=smem, size = 0x4, offset = 0x4, fixed_abs, tag = 'smem constant byte address 0x4 - core index']
  #allocation1 [shape = 'u32[144,128]{1,0:T(1,128)}', space=vmem, size = 0x12000, scoped, tag = 'internal scratch']
  %s0 = inlined_call_operand.hbm [shape: f32[1000,128], index: 0, kind: input, shape index: {}]
  %s1 = inlined_call_operand.hbm [shape: f32[1000,128], index: 1, kind: input, shape index: {}]
  %s2 = inlined_call_operand.hbm [shape: f32[128,128], index: 2, kind: input, shape index: {}]
  %s3 = inlined_call_operand.vmem [shape: f32[2,128], index: 3, kind: input, shape index: {}]
  %s4 = inlined_call_operand.hbm [shape: f32[1000,128], index: 4, kind: output, shape index: {}]
  %s5 = sld [smem:[#allocation0]]
  $region61: #{tpu_custom_call.1} parent=0
    _
  %s7 = ssub.s32 1, %s5
  %s8 = scalar_select 0, %s7, %s5
  $region1: #{tpu_custom_call.1} parent=0
    #allocation2 [shape = 'u8[262144]{0}', space=vmem, size = 0x40000, scoped, tag = 'input window, operand 0']
    #allocation3 [shape = 's32[2]{0}', space=sflag, size = 0x8, scoped, tag = 'scoped memory for tpu_custom_call.1']
    #allocation4 [shape = 's32[2]{0}', space=sflag, size = 0x8, scoped, tag = 'scoped memory for tpu_custom_call.1']
    #allocation5 [shape = 'u8[262144]{0}', space=vmem, size = 0x40000, scoped, tag = 'input window, operand 1']
    #allocation6 [shape = 's32[2]{0}', space=sflag, size = 0x8, scoped, tag = 'scoped memory for tpu_custom_call.1']
    #allocation7 [shape = 'u8[65536]{0}', space=vmem, size = 0x10000, scoped, tag = 'input window, operand 2, single buffered']
    #allocation8 [shape = 'u8[262144]{0}', space=vmem, size = 0x40000, scoped, tag = 'output window, operand 0']
    %9 = vsyncpa [#allocation3], 0
    %s10 = scalar_lea.sflag [#allocation3], 1
    %11 = vsyncpa %s10, 0
    %12 = vsyncpa [#allocation6], 0
    %s13 = scalar_lea.sflag [#allocation6], 1
    %14 = vsyncpa %s13, 0
    %15 = vsyncpa [#allocation4], 0
    %s16 = scalar_lea.sflag [#allocation4], 1
    %17 = vsyncpa %s16, 0
    loop: start=0, step=1, limit=6
    $region2: #{tpu_custom_call.1} parent=1 // loop_pre_header
      _
    $region3: #{tpu_custom_call.1} parent=1 // loop_header
      %s19 = sphi 0, %s23
      %p20 = scmp.ge.s32.totalorder %s19, 6
      %s29 = sphi 0, %s31
      %s32 = sphi 0, %s29
      %s33 = sphi 0, %s32
      %s49 = sphi 0, %s33
      %s55 = sphi 0, %s57
      %s58 = sphi 0, %s55
      %s59 = sphi 0, %s58
      %s75 = sphi 0, %s59
      %s79 = sphi 0, %s79
      %s81 = sphi 0, %s79
      %s82 = sphi 0, %s81
      %s96 = sphi 0, %s82
      %s100 = sphi 0, %s100
      %s102 = sphi 0, %s100
      %s103 = sphi 0, %s102
      %s117 = sphi 0, %s103
      %s123 = sphi 0, %s125
      %s126 = sphi 0, %s123
      %s127 = sphi 0, %s126
      %s143 = sphi 0, %s127
    $region4: #{tpu_custom_call.1} parent=1 // loop_header_branch
      %22 = sbr.rel (%p20) target = $region8
    $region5: #{tpu_custom_call.1} parent=1 // loop_body
      %s24 = ssub.s32 %s19, 1
      %s25 = ssub.s32 %s19, 2
      %s26 = sadd.s32 %s19, 1
      %s27 = ssub.s32 %s19, %s26
      %p28 = scmp.eq.s32.totalorder %s27, 0
      %s30 = sadd.s32 %s29, 1
      %s31 = scalar_select %p28, %s29, %s30
      %p34 = pneg %p28
      %p35 = scmp.eq.s32.totalorder %s19, 3
      %p36 = por %p34, %p35
      %p37 = scmp.ne.s32.totalorder %s29, %s32
      %p38 = scmp.eq.s32.totalorder %s19, 0
      %p39 = por %p37, %p38
      %p40 = scmp.ne.s32.totalorder %s29, %s32
      %p41 = scmp.eq.s32.totalorder %s24, 3
      %p42 = por %p40, %p41
      %p43 = scmp.ne.s32.totalorder %s32, %s33
      %p44 = scmp.eq.s32.totalorder %s24, 0
      %p45 = por %p43, %p44
      %p46 = scmp.ne.s32.totalorder %s32, %s33
      %p47 = scmp.eq.s32.totalorder %s25, 3
      %p48 = por %p46, %p47
      %p50 = scmp.ne.s32.totalorder %s33, %s49
      %p51 = scmp.eq.s32.totalorder %s25, 0
      %p52 = por %p50, %p51
      %s53 = ssub.s32 %s19, %s26
      %p54 = scmp.eq.s32.totalorder %s53, 0
      %s56 = sadd.s32 %s55, 1
      %s57 = scalar_select %p54, %s55, %s56
      %p60 = pneg %p54
      %p61 = scmp.eq.s32.totalorder %s19, 3
      %p62 = por %p60, %p61
      %p63 = scmp.ne.s32.totalorder %s55, %s58
      %p64 = scmp.eq.s32.totalorder %s19, 0
      %p65 = por %p63, %p64
      %p66 = scmp.ne.s32.totalorder %s55, %s58
      %p67 = scmp.eq.s32.totalorder %s24, 3
      %p68 = por %p66, %p67
      %p69 = scmp.ne.s32.totalorder %s58, %s59
      %p70 = scmp.eq.s32.totalorder %s24, 0
      %p71 = por %p69, %p70
      %p72 = scmp.ne.s32.totalorder %s58, %s59
      %p73 = scmp.eq.s32.totalorder %s25, 3
      %p74 = por %p72, %p73
      %p76 = scmp.ne.s32.totalorder %s59, %s75
      %p77 = scmp.eq.s32.totalorder %s25, 0
      %p78 = por %p76, %p77
      %s80 = sadd.s32 %s79, 1
      %p83 = scmp.eq.s32.totalorder %s19, 3
      %p84 = scmp.ne.s32.totalorder %s79, %s81
      %p85 = scmp.eq.s32.totalorder %s19, 0
      %p86 = por %p84, %p85
      %p87 = scmp.ne.s32.totalorder %s79, %s81
      %p88 = scmp.eq.s32.totalorder %s24, 3
      %p89 = por %p87, %p88
      %p90 = scmp.ne.s32.totalorder %s81, %s82
      %p91 = scmp.eq.s32.totalorder %s24, 0
      %p92 = por %p90, %p91
      %p93 = scmp.ne.s32.totalorder %s81, %s82
      %p94 = scmp.eq.s32.totalorder %s25, 3
      %p95 = por %p93, %p94
      %p97 = scmp.ne.s32.totalorder %s82, %s96
      %p98 = scmp.eq.s32.totalorder %s25, 0
      %p99 = por %p97, %p98
      %s101 = sadd.s32 %s100, 1
      %p104 = scmp.eq.s32.totalorder %s19, 3
      %p105 = scmp.ne.s32.totalorder %s100, %s102
      %p106 = scmp.eq.s32.totalorder %s19, 0
      %p107 = por %p105, %p106
      %p108 = scmp.ne.s32.totalorder %s100, %s102
      %p109 = scmp.eq.s32.totalorder %s24, 3
      %p110 = por %p108, %p109
      %p111 = scmp.ne.s32.totalorder %s102, %s103
      %p112 = scmp.eq.s32.totalorder %s24, 0
      %p113 = por %p111, %p112
      %p114 = scmp.ne.s32.totalorder %s102, %s103
      %p115 = scmp.eq.s32.totalorder %s25, 3
      %p116 = por %p114, %p115
      %p118 = scmp.ne.s32.totalorder %s103, %s117
      %p119 = scmp.eq.s32.totalorder %s25, 0
      %p120 = por %p118, %p119
      %s121 = ssub.s32 %s19, %s26
      %p122 = scmp.eq.s32.totalorder %s121, 0
      %s124 = sadd.s32 %s123, 1
      %s125 = scalar_select %p122, %s123, %s124
      %p128 = pneg %p122
      %p129 = scmp.eq.s32.totalorder %s19, 3
      %p130 = por %p128, %p129
      %p131 = scmp.ne.s32.totalorder %s123, %s126
      %p132 = scmp.eq.s32.totalorder %s19, 0
      %p133 = por %p131, %p132
      %p134 = scmp.ne.s32.totalorder %s123, %s126
      %p135 = scmp.eq.s32.totalorder %s24, 3
      %p136 = por %p134, %p135
      %p137 = scmp.ne.s32.totalorder %s126, %s127
      %p138 = scmp.eq.s32.totalorder %s24, 0
      %p139 = por %p137, %p138
      %p140 = scmp.ne.s32.totalorder %s126, %s127
      %p141 = scmp.eq.s32.totalorder %s25, 3
      %p142 = por %p140, %p141
      %p144 = scmp.ne.s32.totalorder %s127, %s143
      %p145 = scmp.eq.s32.totalorder %s25, 0
      %p146 = por %p144, %p145
      %p147 = scmp.le.s32.totalorder 1, %s19
      %p148 = scmp.lt.s32.totalorder %s19, 5
      %p149 = pnand %p147, %p148
      %p150 = pneg %p149
      // Predicated region
      $region9: #{tpu_custom_call.1} parent=5 // pred_check
        _
      $region10: #{tpu_custom_call.1} parent=5 // pred_check_branch
        %152 = sbr.rel (%p149) target = $region12
      $region11: #{tpu_custom_call.1} parent=5 // pred_region
        %s153 = ssub.s32 %s19, 1
        // Predicated region
        $region13: #{tpu_custom_call.1} parent=11 // pred_check
          %p154 = pneg %p92
        $region14: #{tpu_custom_call.1} parent=11 // pred_check_branch
          %156 = sbr.rel (%p154) target = $region16
        $region15: #{tpu_custom_call.1} parent=11 // pred_region
          %s158 = ssub.s32 2048, 2048
          %159 = vsyncadd [#allocation6], %s158
          %s160 = sshll.u32 [#allocation7], 4
          %s161 = int_to_ptr.vmem [resolvable:$true] %s160
          %166 = dma.hbm_to_vmem [thread:$0]  %s2, 2048, %s161, [#allocation6], 128, 128, 8
        $region16: #{tpu_custom_call.1} parent=11 // pred_fallthru
          _
        // Predicated region
        $region17: #{tpu_custom_call.1} parent=11 // pred_check
          %p167 = pneg %p113
        $region18: #{tpu_custom_call.1} parent=11 // pred_check_branch
          %169 = sbr.rel (%p167) target = $region20
        $region19: #{tpu_custom_call.1} parent=11 // pred_region
          _
        $region20: #{tpu_custom_call.1} parent=11 // pred_fallthru
          _
      $region12: #{tpu_custom_call.1} parent=5 // pred_fallthru
        _
      %p170 = scmp.lt.s32.totalorder %s19, 4
      // Predicated region
      $region21: #{tpu_custom_call.1} parent=5 // pred_check
        %p171 = pneg %p170
      $region22: #{tpu_custom_call.1} parent=5 // pred_check_branch
        %173 = sbr.rel (%p171) target = $region24
      $region23: #{tpu_custom_call.1} parent=5 // pred_region
        // Predicated region
        $region25: #{tpu_custom_call.1} parent=23 // pred_check
          %p174 = pneg %p39
        $region26: #{tpu_custom_call.1} parent=23 // pred_check_branch
          %176 = sbr.rel (%p174) target = $region28
        $region27: #{tpu_custom_call.1} parent=23 // pred_region
          %s177 = sand.u32 %s29, 1
          %s178 = scalar_lea.sflag [#allocation3], %s177
          %s179 = sand.u32 %s29, 1
          %s180 = smul.addr %s179, 256
          %s181 = scalar_lea.vmem [#allocation2], %s180
          %s182 = smul.u32 32, %s19
          %s183 = ssub.s32 125, %s182
          %p184 = scmp.lt.s32.totalorder %s183, 32
          %s185 = scalar_select %p184, %s183, 32
          %s186 = smul.u32 128, %s185
          %s188 = ssub.s32 4096, %s186
          %189 = vsyncadd %s178, %s188
          %p190 = scmp.ne.s32.totalorder 0, %s186
          %s191 = smul.addr %s182, 128
          %s192 = scalar_lea.hbm %s0, %s191
          %s193 = smul.u32 8, %s185
          %s194 = sshll.u32 %s181, 4
          %s195 = int_to_ptr.vmem [resolvable:$true] %s194
          %s196 = sshll.u32 %s193, 4
          %200 = dma.hbm_to_vmem [thread:$0]  (%p190), %s192, %s196, %s195, %s178, 128, 128, 8
        $region28: #{tpu_custom_call.1} parent=23 // pred_fallthru
          _
        // Predicated region
        $region29: #{tpu_custom_call.1} parent=23 // pred_check
          %p201 = pneg %p65
        $region30: #{tpu_custom_call.1} parent=23 // pred_check_branch
          %203 = sbr.rel (%p201) target = $region32
        $region31: #{tpu_custom_call.1} parent=23 // pred_region
          %s204 = sand.u32 %s19, 1
          %s205 = scalar_lea.sflag [#allocation6], %s204
          %s206 = sand.u32 %s55, 1
          %s207 = smul.addr %s206, 256
          %s208 = scalar_lea.vmem [#allocation5], %s207
          %s209 = smul.u32 32, %s19
          %s210 = ssub.s32 125, %s209
          %p211 = scmp.lt.s32.totalorder %s210, 32
          %s212 = scalar_select %p211, %s210, 32
          %s213 = smul.u32 128, %s212
          %s215 = ssub.s32 4096, %s213
          %216 = vsyncadd %s205, %s215
          %p217 = scmp.ne.s32.totalorder 0, %s213
          %s218 = smul.addr %s209, 128
          %s219 = scalar_lea.hbm %s1, %s218
          %s220 = smul.u32 8, %s212
          %s221 = sshll.u32 %s208, 4
          %s222 = int_to_ptr.vmem [resolvable:$true] %s221
          %s223 = sshll.u32 %s220, 4
          %227 = dma.hbm_to_vmem [thread:$0]  (%p217), %s219, %s223, %s222, %s205, 128, 128, 8
        $region32: #{tpu_custom_call.1} parent=23 // pred_fallthru
          _
      $region24: #{tpu_custom_call.1} parent=5 // pred_fallthru
        _
      %p228 = scmp.le.s32.totalorder 1, %s19
      %p229 = scmp.lt.s32.totalorder %s19, 5
      %p230 = pnand %p228, %p229
      %p231 = pneg %p230
      // Predicated region
      $region33: #{tpu_custom_call.1} parent=5 // pred_check
        _
      $region34: #{tpu_custom_call.1} parent=5 // pred_check_branch
        %233 = sbr.rel (%p230) target = $region36
      $region35: #{tpu_custom_call.1} parent=5 // pred_region
        %s234 = ssub.s32 %s19, 1
        %s235 = sand.u32 %s32, 1
        %s236 = scalar_lea.sflag [#allocation3], %s235
        %s237 = sand.u32 %s32, 1
        %s238 = smul.addr %s237, 256
        %s239 = scalar_lea.vmem [#allocation2], %s238
        // Predicated region
        $region37: #{tpu_custom_call.1} parent=35 // pred_check
          %p240 = pneg %p45
        $region38: #{tpu_custom_call.1} parent=35 // pred_check_branch
          %242 = sbr.rel (%p240) target = $region40
        $region39: #{tpu_custom_call.1} parent=35 // pred_region
          %243 = dma.done %s236, 4096
        $region40: #{tpu_custom_call.1} parent=35 // pred_fallthru
          _
        %s244 = sand.u32 %s24, 1
        %s245 = scalar_lea.sflag [#allocation6], %s244
        %s246 = sand.u32 %s58, 1
        %s247 = smul.addr %s246, 256
        %s248 = scalar_lea.vmem [#allocation5], %s247
        // Predicated region
        $region41: #{tpu_custom_call.1} parent=35 // pred_check
          %p249 = pneg %p71
        $region42: #{tpu_custom_call.1} parent=35 // pred_check_branch
          %251 = sbr.rel (%p249) target = $region44
        $region43: #{tpu_custom_call.1} parent=35 // pred_region
          %252 = dma.done %s245, 4096
        $region44: #{tpu_custom_call.1} parent=35 // pred_fallthru
          _
        // Predicated region
        $region45: #{tpu_custom_call.1} parent=35 // pred_check
          %p253 = pneg %p92
        $region46: #{tpu_custom_call.1} parent=35 // pred_check_branch
          %255 = sbr.rel (%p253) target = $region48
        $region47: #{tpu_custom_call.1} parent=35 // pred_region
          %256 = dma.done [#allocation6], 2048
        $region48: #{tpu_custom_call.1} parent=35 // pred_fallthru
          _
        %s257 = sand.u32 %s32, 1
        %s258 = scalar_lea.sflag [#allocation3], %s257
        %s259 = sand.u32 %s32, 1
        %s260 = smul.addr %s259, 256
        %s261 = scalar_lea.vmem [#allocation2], %s260
        %p262 = pneg %p45
        %p263 = pneg %p42
        %s264 = sand.u32 %s24, 1
        %s265 = scalar_lea.sflag [#allocation6], %s264
        %s266 = sand.u32 %s58, 1
        %s267 = smul.addr %s266, 256
        %s268 = scalar_lea.vmem [#allocation5], %s267
        %p269 = pneg %p71
        %p270 = pneg %p68
        %p271 = pneg %p92
        %p272 = pneg %p89
        %p273 = pneg %p113
        %p274 = pneg %p110
        %p275 = pneg %p139
        %p276 = pneg %p136
        %s277 = sand.u32 %s126, 1
        %s278 = scalar_lea.sflag [#allocation4], %s277
        %s279 = sand.u32 %s126, 1
        %s280 = smul.addr %s279, 256
        %s281 = scalar_lea.vmem [#allocation8], %s280
        %s282 = smul.u32 32, %s24
        %s283 = ssub.s32 125, %s282
        %p284 = scmp.lt.s32.totalorder %s283, 32
        %s285 = scalar_select %p284, %s283, 32
        %s286 = smul.u32 128, %s285
        %s287 = smul.u32 32, %s24
        %s288 = ssub.s32 125, %s287
        %p289 = scmp.lt.s32.totalorder %s288, 32
        %s290 = scalar_select %p289, %s288, 32
        %s291 = smul.u32 128, %s290
        %s292 = smul.u32 32, %s24
        %s293 = ssub.s32 125, %s292
        %p294 = scmp.lt.s32.totalorder %s293, 32
        %s295 = scalar_select %p294, %s293, 32
        %s296 = smul.u32 128, %s295
        %v297 = vld [vmem:[%s239] sm:$0xff]
        %v298 = vld [vmem:[%s239 + $0x8] sm:$0xff]
        %v299 = vld [vmem:[%s239 + $0x10] sm:$0xff]
        %v300 = vld [vmem:[%s239 + $0x18] sm:$0xff]
        %v301 = vld [vmem:[%s239 + $0x20] sm:$0xff]
        %v302 = vld [vmem:[%s239 + $0x28] sm:$0xff]
        %v303 = vld [vmem:[%s239 + $0x30] sm:$0xff]
        %v304 = vld [vmem:[%s239 + $0x38] sm:$0xff]
        %v305 = vld [vmem:[%s239 + $0x40] sm:$0xff]
        %v306 = vld [vmem:[%s239 + $0x48] sm:$0xff]
        %v307 = vld [vmem:[%s239 + $0x50] sm:$0xff]
        %v308 = vld [vmem:[%s239 + $0x58] sm:$0xff]
        %v309 = vld [vmem:[%s239 + $0x60] sm:$0xff]
        %v310 = vld [vmem:[%s239 + $0x68] sm:$0xff]
        %v311 = vld [vmem:[%s239 + $0x70] sm:$0xff]
        %v312 = vld [vmem:[%s239 + $0x78] sm:$0xff]
        %v313 = vld [vmem:[%s239 + $0x80] sm:$0xff]
        %v314 = vld [vmem:[%s239 + $0x88] sm:$0xff]
        %v315 = vld [vmem:[%s239 + $0x90] sm:$0xff]
        %v316 = vld [vmem:[%s239 + $0x98] sm:$0xff]
        %v317 = vld [vmem:[%s239 + $0xa0] sm:$0xff]
        %v318 = vld [vmem:[%s239 + $0xa8] sm:$0xff]
        %v319 = vld [vmem:[%s239 + $0xb0] sm:$0xff]
        %v320 = vld [vmem:[%s239 + $0xb8] sm:$0xff]
        %v321 = vld [vmem:[%s239 + $0xc0] sm:$0xff]
        %v322 = vld [vmem:[%s239 + $0xc8] sm:$0xff]
        %v323 = vld [vmem:[%s239 + $0xd0] sm:$0xff]
        %v324 = vld [vmem:[%s239 + $0xd8] sm:$0xff]
        %v325 = vld [vmem:[%s239 + $0xe0] sm:$0xff]
        %v326 = vld [vmem:[%s239 + $0xe8] sm:$0xff]
        %v327 = vld [vmem:[%s239 + $0xf0] sm:$0xff]
        %v328 = vld [vmem:[%s239 + $0xf8] sm:$0xff]
        %v329 = vld [vmem:[%s248] sm:$0xff]
        %v330 = vld [vmem:[%s248 + $0x8] sm:$0xff]
        %v331 = vld [vmem:[%s248 + $0x10] sm:$0xff]
        %v332 = vld [vmem:[%s248 + $0x18] sm:$0xff]
        %v333 = vld [vmem:[%s248 + $0x20] sm:$0xff]
        %v334 = vld [vmem:[%s248 + $0x28] sm:$0xff]
        %v335 = vld [vmem:[%s248 + $0x30] sm:$0xff]
        %v336 = vld [vmem:[%s248 + $0x38] sm:$0xff]
        %v337 = vld [vmem:[%s248 + $0x40] sm:$0xff]
        %v338 = vld [vmem:[%s248 + $0x48] sm:$0xff]
        %v339 = vld [vmem:[%s248 + $0x50] sm:$0xff]
        %v340 = vld [vmem:[%s248 + $0x58] sm:$0xff]
        %v341 = vld [vmem:[%s248 + $0x60] sm:$0xff]
        %v342 = vld [vmem:[%s248 + $0x68] sm:$0xff]
        %v343 = vld [vmem:[%s248 + $0x70] sm:$0xff]
        %v344 = vld [vmem:[%s248 + $0x78] sm:$0xff]
        %v345 = vld [vmem:[%s248 + $0x80] sm:$0xff]
        %v346 = vld [vmem:[%s248 + $0x88] sm:$0xff]
        %v347 = vld [vmem:[%s248 + $0x90] sm:$0xff]
        %v348 = vld [vmem:[%s248 + $0x98] sm:$0xff]
        %v349 = vld [vmem:[%s248 + $0xa0] sm:$0xff]
        %v350 = vld [vmem:[%s248 + $0xa8] sm:$0xff]
        %v351 = vld [vmem:[%s248 + $0xb0] sm:$0xff]
        %v352 = vld [vmem:[%s248 + $0xb8] sm:$0xff]
        %v353 = vld [vmem:[%s248 + $0xc0] sm:$0xff]
        %v354 = vld [vmem:[%s248 + $0xc8] sm:$0xff]
        %v355 = vld [vmem:[%s248 + $0xd0] sm:$0xff]
        %v356 = vld [vmem:[%s248 + $0xd8] sm:$0xff]
        %v357 = vld [vmem:[%s248 + $0xe0] sm:$0xff]
        %v358 = vld [vmem:[%s248 + $0xe8] sm:$0xff]
        %v359 = vld [vmem:[%s248 + $0xf0] sm:$0xff]
        %v360 = vld [vmem:[%s248 + $0xf8] sm:$0xff]
        %v361 = vld [vmem:[#allocation7] sm:$0xff]
        %v362 = vld [vmem:[#allocation7 + $0x8] sm:$0xff]
        %v363 = vld [vmem:[#allocation7 + $0x10] sm:$0xff]
        %v364 = vld [vmem:[#allocation7 + $0x18] sm:$0xff]
        %v365 = vld [vmem:[#allocation7 + $0x20] sm:$0xff]
        %v366 = vld [vmem:[#allocation7 + $0x28] sm:$0xff]
        %v367 = vld [vmem:[#allocation7 + $0x30] sm:$0xff]
        %v368 = vld [vmem:[#allocation7 + $0x38] sm:$0xff]
        %v369 = vld [vmem:[#allocation7 + $0x40] sm:$0xff]
        %v370 = vld [vmem:[#allocation7 + $0x48] sm:$0xff]
        %v371 = vld [vmem:[#allocation7 + $0x50] sm:$0xff]
        %v372 = vld [vmem:[#allocation7 + $0x58] sm:$0xff]
        %v373 = vld [vmem:[#allocation7 + $0x60] sm:$0xff]
        %v374 = vld [vmem:[#allocation7 + $0x68] sm:$0xff]
        %v375 = vld [vmem:[#allocation7 + $0x70] sm:$0xff]
        %v376 = vld [vmem:[#allocation7 + $0x78] sm:$0xff]
        %v377 = vld [vmem:[%s3] sm:$0x1]
        %v378 = vld [vmem:[%s3 + $0x1] sm:$0x1]
        %v379 = vlaneseq
        %v380 = vshrl.u32 %v379, 7
        %v381 = vsub.s32 0, %v380
        %v382 = vrot.slane %v377, %v381
        %383 = vmatprep.subr.mxu0 0.0
        %384 = vmatpush1.msra.mxu0 %v376
        %385 = vmatprep.subr.mxu0 0.0
        %386 = vmatpush1.msra.mxu0 %v375
        %387 = vmatprep.subr.mxu0 0.0
        %388 = vmatpush1.msra.mxu0 %v374
        %389 = vmatprep.subr.mxu0 0.0
        %390 = vmatpush1.msra.mxu0 %v373
        %391 = vmatprep.subr.mxu0 0.0
        %392 = vmatpush1.msra.mxu0 %v372
        %393 = vmatprep.subr.mxu0 0.0
        %394 = vmatpush1.msra.mxu0 %v371
        %395 = vmatprep.subr.mxu0 0.0
        %396 = vmatpush1.msra.mxu0 %v370
        %397 = vmatprep.subr.mxu0 0.0
        %398 = vmatpush1.msra.mxu0 %v369
        %399 = vmatprep.subr.mxu0 0.0
        %400 = vmatpush1.msra.mxu0 %v368
        %401 = vmatprep.subr.mxu0 0.0
        %402 = vmatpush1.msra.mxu0 %v367
        %403 = vmatprep.subr.mxu0 0.0
        %404 = vmatpush1.msra.mxu0 %v366
        %405 = vmatprep.subr.mxu0 0.0
        %406 = vmatpush1.msra.mxu0 %v365
        %407 = vmatprep.subr.mxu0 0.0
        %408 = vmatpush1.msra.mxu0 %v364
        %409 = vmatprep.subr.mxu0 0.0
        %410 = vmatpush1.msra.mxu0 %v363
        %411 = vmatprep.subr.mxu0 0.0
        %412 = vmatpush1.msra.mxu0 %v362
        %413 = vmatprep.subr.mxu0 0.0
        %414 = vmatpush1.msra.mxu0 %v361
        %415 = vmatprep.subr.mxu0 0.0
        %416 = vmatpush2.msra.mxu0 0.0
        %417 = vmatprep.subr.mxu0 0.0
        %418 = vmatpush2.msra.mxu0 0.0
        %419 = vmatprep.subr.mxu0 0.0
        %420 = vmatpush2.msra.mxu0 0.0
        %421 = vmatprep.subr.mxu0 0.0
        %422 = vmatpush2.msra.mxu0 0.0
        %423 = vmatprep.subr.mxu0 0.0
        %424 = vmatpush2.msra.mxu0 0.0
        %425 = vmatprep.subr.mxu0 0.0
        %426 = vmatpush2.msra.mxu0 0.0
        %427 = vmatprep.subr.mxu0 0.0
        %428 = vmatpush2.msra.mxu0 0.0
        %429 = vmatprep.subr.mxu0 0.0
        %430 = vmatpush2.msra.mxu0 0.0
        %431 = vmatprep.subr.mxu0 0.0
        %432 = vmatpush2.msra.mxu0 0.0
        %433 = vmatprep.subr.mxu0 0.0
        %434 = vmatpush2.msra.mxu0 0.0
        %435 = vmatprep.subr.mxu0 0.0
        %436 = vmatpush2.msra.mxu0 0.0
        %437 = vmatprep.subr.mxu0 0.0
        %438 = vmatpush2.msra.mxu0 0.0
        %439 = vmatprep.subr.mxu0 0.0
        %440 = vmatpush2.msra.mxu0 0.0
        %441 = vmatprep.subr.mxu0 0.0
        %442 = vmatpush2.msra.mxu0 0.0
        %443 = vmatprep.subr.mxu0 0.0
        %444 = vmatpush2.msra.mxu0 0.0
        %445 = vmatprep.subr.mxu0 0.0
        %446 = vmatpush2.msra.mxu0 0.0
        %447 = vmatprep.mubr.f32.mxu0 0.0
        %448 = vmatmul.mubr.f32.gmra.mxu0 %v297
        %v449 = vpop.f32.mrf.mxu0
        %v450 = vadd.f32 %v382, %v449
        %v451 = vpop.f32.mrf.mxu0
        %452 = vmatprep.mubr.f32.mxu0 0.0
        %453 = vmatmul.mubr.f32.gmra.mxu0 %v298
        %v454 = vpop.f32.mrf.mxu0
        %v455 = vadd.f32 %v382, %v454
        %v456 = vpop.f32.mrf.mxu0
        %457 = vmatprep.mubr.f32.mxu0 0.0
        %458 = vmatmul.mubr.f32.gmra.mxu0 %v299
        %v459 = vpop.f32.mrf.mxu0
        %v460 = vadd.f32 %v382, %v459
        %v461 = vpop.f32.mrf.mxu0
        %462 = vmatprep.mubr.f32.mxu0 0.0
        %463 = vmatmul.mubr.f32.gmra.mxu0 %v300
        %v464 = vpop.f32.mrf.mxu0
        %v465 = vadd.f32 %v382, %v464
        %v466 = vpop.f32.mrf.mxu0
        %467 = vmatprep.mubr.f32.mxu0 0.0
        %468 = vmatmul.mubr.f32.gmra.mxu0 %v301
        %v469 = vpop.f32.mrf.mxu0
        %v470 = vadd.f32 %v382, %v469
        %v471 = vpop.f32.mrf.mxu0
        %472 = vmatprep.mubr.f32.mxu0 0.0
        %473 = vmatmul.mubr.f32.gmra.mxu0 %v302
        %v474 = vpop.f32.mrf.mxu0
        %v475 = vadd.f32 %v382, %v474
        %v476 = vpop.f32.mrf.mxu0
        %477 = vmatprep.mubr.f32.mxu0 0.0
        %478 = vmatmul.mubr.f32.gmra.mxu0 %v303
        %v479 = vpop.f32.mrf.mxu0
        %v480 = vadd.f32 %v382, %v479
        %v481 = vpop.f32.mrf.mxu0
        %482 = vmatprep.mubr.f32.mxu0 0.0
        %483 = vmatmul.mubr.f32.gmra.mxu0 %v304
        %v484 = vpop.f32.mrf.mxu0
        %v485 = vadd.f32 %v382, %v484
        %v486 = vpop.f32.mrf.mxu0
        %487 = vmatprep.mubr.f32.mxu0 0.0
        %488 = vmatmul.mubr.f32.gmra.mxu0 %v305
        %v489 = vpop.f32.mrf.mxu0
        %v490 = vadd.f32 %v382, %v489
        %v491 = vpop.f32.mrf.mxu0
        %492 = vmatprep.mubr.f32.mxu0 0.0
        %493 = vmatmul.mubr.f32.gmra.mxu0 %v306
        %v494 = vpop.f32.mrf.mxu0
        %v495 = vadd.f32 %v382, %v494
        %v496 = vpop.f32.mrf.mxu0
        %497 = vmatprep.mubr.f32.mxu0 0.0
        %498 = vmatmul.mubr.f32.gmra.mxu0 %v307
        %v499 = vpop.f32.mrf.mxu0
        %v500 = vadd.f32 %v382, %v499
        %v501 = vpop.f32.mrf.mxu0
        %502 = vmatprep.mubr.f32.mxu0 0.0
        %503 = vmatmul.mubr.f32.gmra.mxu0 %v308
        %v504 = vpop.f32.mrf.mxu0
        %v505 = vadd.f32 %v382, %v504
        %v506 = vpop.f32.mrf.mxu0
        %507 = vmatprep.mubr.f32.mxu0 0.0
        %508 = vmatmul.mubr.f32.gmra.mxu0 %v309
        %v509 = vpop.f32.mrf.mxu0
        %v510 = vadd.f32 %v382, %v509
        %v511 = vpop.f32.mrf.mxu0
        %512 = vmatprep.mubr.f32.mxu0 0.0
        %513 = vmatmul.mubr.f32.gmra.mxu0 %v310
        %v514 = vpop.f32.mrf.mxu0
        %v515 = vadd.f32 %v382, %v514
        %v516 = vpop.f32.mrf.mxu0
        %517 = vmatprep.mubr.f32.mxu0 0.0
        %518 = vmatmul.mubr.f32.gmra.mxu0 %v311
        %v519 = vpop.f32.mrf.mxu0
        %v520 = vadd.f32 %v382, %v519
        %v521 = vpop.f32.mrf.mxu0
        %522 = vmatprep.mubr.f32.mxu0 0.0
        %523 = vmatmul.mubr.f32.gmra.mxu0 %v312
        %v524 = vpop.f32.mrf.mxu0
        %v525 = vadd.f32 %v382, %v524
        %v526 = vpop.f32.mrf.mxu0
        %527 = vmatprep.mubr.f32.mxu0 0.0
        %528 = vmatmul.mubr.f32.gmra.mxu0 %v313
        %v529 = vpop.f32.mrf.mxu0
        %v530 = vadd.f32 %v382, %v529
        %v531 = vpop.f32.mrf.mxu0
        %532 = vmatprep.mubr.f32.mxu0 0.0
        %533 = vmatmul.mubr.f32.gmra.mxu0 %v314
        %v534 = vpop.f32.mrf.mxu0
        %v535 = vadd.f32 %v382, %v534
        %v536 = vpop.f32.mrf.mxu0
        %537 = vmatprep.mubr.f32.mxu0 0.0
        %538 = vmatmul.mubr.f32.gmra.mxu0 %v315
        %v539 = vpop.f32.mrf.mxu0
        %v540 = vadd.f32 %v382, %v539
        %v541 = vpop.f32.mrf.mxu0
        %542 = vmatprep.mubr.f32.mxu0 0.0
        %543 = vmatmul.mubr.f32.gmra.mxu0 %v316
        %v544 = vpop.f32.mrf.mxu0
        %v545 = vadd.f32 %v382, %v544
        %v546 = vpop.f32.mrf.mxu0
        %547 = vmatprep.mubr.f32.mxu0 0.0
        %548 = vmatmul.mubr.f32.gmra.mxu0 %v317
        %v549 = vpop.f32.mrf.mxu0
        %v550 = vadd.f32 %v382, %v549
        %v551 = vpop.f32.mrf.mxu0
        %552 = vmatprep.mubr.f32.mxu0 0.0
        %553 = vmatmul.mubr.f32.gmra.mxu0 %v318
        %v554 = vpop.f32.mrf.mxu0
        %v555 = vadd.f32 %v382, %v554
        %v556 = vpop.f32.mrf.mxu0
        %557 = vmatprep.mubr.f32.mxu0 0.0
        %558 = vmatmul.mubr.f32.gmra.mxu0 %v319
        %v559 = vpop.f32.mrf.mxu0
        %v560 = vadd.f32 %v382, %v559
        %v561 = vpop.f32.mrf.mxu0
        %562 = vmatprep.mubr.f32.mxu0 0.0
        %563 = vmatmul.mubr.f32.gmra.mxu0 %v320
        %v564 = vpop.f32.mrf.mxu0
        %v565 = vadd.f32 %v382, %v564
        %v566 = vpop.f32.mrf.mxu0
        %567 = vmatprep.mubr.f32.mxu0 0.0
        %568 = vmatmul.mubr.f32.gmra.mxu0 %v321
        %v569 = vpop.f32.mrf.mxu0
        %v570 = vadd.f32 %v382, %v569
        %v571 = vpop.f32.mrf.mxu0
        %572 = vmatprep.mubr.f32.mxu0 0.0
        %573 = vmatmul.mubr.f32.gmra.mxu0 %v322
        %v574 = vpop.f32.mrf.mxu0
        %v575 = vadd.f32 %v382, %v574
        %v576 = vpop.f32.mrf.mxu0
        %577 = vmatprep.mubr.f32.mxu0 0.0
        %578 = vmatmul.mubr.f32.gmra.mxu0 %v323
        %v579 = vpop.f32.mrf.mxu0
        %v580 = vadd.f32 %v382, %v579
        %v581 = vpop.f32.mrf.mxu0
        %582 = vmatprep.mubr.f32.mxu0 0.0
        %583 = vmatmul.mubr.f32.gmra.mxu0 %v324
        %v584 = vpop.f32.mrf.mxu0
        %v585 = vadd.f32 %v382, %v584
        %v586 = vpop.f32.mrf.mxu0
        %587 = vmatprep.mubr.f32.mxu0 0.0
        %588 = vmatmul.mubr.f32.gmra.mxu0 %v325
        %v589 = vpop.f32.mrf.mxu0
        %v590 = vadd.f32 %v382, %v589
        %v591 = vpop.f32.mrf.mxu0
        %592 = vmatprep.mubr.f32.mxu0 0.0
        %593 = vmatmul.mubr.f32.gmra.mxu0 %v326
        %v594 = vpop.f32.mrf.mxu0
        %v595 = vadd.f32 %v382, %v594
        %v596 = vpop.f32.mrf.mxu0
        %597 = vmatprep.mubr.f32.mxu0 0.0
        %598 = vmatmul.mubr.f32.gmra.mxu0 %v327
        %v599 = vpop.f32.mrf.mxu0
        %v600 = vadd.f32 %v382, %v599
        %v601 = vpop.f32.mrf.mxu0
        %602 = vmatprep.mubr.f32.mxu0 0.0
        %603 = vmatmul.mubr.f32.gmra.mxu0 %v328
        %v604 = vpop.f32.mrf.mxu0
        %v605 = vadd.f32 %v382, %v604
        %v606 = vpop.f32.mrf.mxu0
        %607 = vdwg.mxu0
        %v608 = vtanh.pop %v450
        %v609 = vtanh.pop %v455
        %v610 = vtanh.pop %v460
        %v611 = vtanh.pop %v465
        %v612 = vtanh.pop %v470
        %v613 = vtanh.pop %v475
        %v614 = vtanh.pop %v480
        %v615 = vtanh.pop %v485
        %v616 = vtanh.pop %v490
        %v617 = vtanh.pop %v495
        %v618 = vtanh.pop %v500
        %v619 = vtanh.pop %v505
        %v620 = vtanh.pop %v510
        %v621 = vtanh.pop %v515
        %v622 = vtanh.pop %v520
        %v623 = vtanh.pop %v525
        %v624 = vtanh.pop %v530
        %v625 = vtanh.pop %v535
        %v626 = vtanh.pop %v540
        %v627 = vtanh.pop %v545
        %v628 = vtanh.pop %v550
        %v629 = vtanh.pop %v555
        %v630 = vtanh.pop %v560
        %v631 = vtanh.pop %v565
        %v632 = vtanh.pop %v570
        %v633 = vtanh.pop %v575
        %v634 = vtanh.pop %v580
        %v635 = vtanh.pop %v585
        %v636 = vtanh.pop %v590
        %v637 = vtanh.pop %v595
        %v638 = vtanh.pop %v600
        %v639 = vtanh.pop %v605
        %640 = vmatprep.subr.mxu0 0.0
        %641 = vmatpush1.msra.mxu0 %v376
        %642 = vmatprep.subr.mxu0 0.0
        %643 = vmatpush1.msra.mxu0 %v375
        %644 = vmatprep.subr.mxu0 0.0
        %645 = vmatpush1.msra.mxu0 %v374
        %646 = vmatprep.subr.mxu0 0.0
        %647 = vmatpush1.msra.mxu0 %v373
        %648 = vmatprep.subr.mxu0 0.0
        %649 = vmatpush1.msra.mxu0 %v372
        %650 = vmatprep.subr.mxu0 0.0
        %651 = vmatpush1.msra.mxu0 %v371
        %652 = vmatprep.subr.mxu0 0.0
        %653 = vmatpush1.msra.mxu0 %v370
        %654 = vmatprep.subr.mxu0 0.0
        %655 = vmatpush1.msra.mxu0 %v369
        %656 = vmatprep.subr.mxu0 0.0
        %657 = vmatpush1.msra.mxu0 %v368
        %658 = vmatprep.subr.mxu0 0.0
        %659 = vmatpush1.msra.mxu0 %v367
        %660 = vmatprep.subr.mxu0 0.0
        %661 = vmatpush1.msra.mxu0 %v366
        %662 = vmatprep.subr.mxu0 0.0
        %663 = vmatpush1.msra.mxu0 %v365
        %664 = vmatprep.subr.mxu0 0.0
        %665 = vmatpush1.msra.mxu0 %v364
        %666 = vmatprep.subr.mxu0 0.0
        %667 = vmatpush1.msra.mxu0 %v363
        %668 = vmatprep.subr.mxu0 0.0
        %669 = vmatpush1.msra.mxu0 %v362
        %670 = vmatprep.subr.mxu0 0.0
        %671 = vmatpush1.msra.mxu0 %v361
        %672 = vmatprep.subr.mxu0 0.0
        %673 = vmatpush2.msra.mxu0 0.0
        %674 = vmatprep.subr.mxu0 0.0
        %675 = vmatpush2.msra.mxu0 0.0
        %676 = vmatprep.subr.mxu0 0.0
        %677 = vmatpush2.msra.mxu0 0.0
        %678 = vmatprep.subr.mxu0 0.0
        %679 = vmatpush2.msra.mxu0 0.0
        %680 = vmatprep.subr.mxu0 0.0
        %681 = vmatpush2.msra.mxu0 0.0
        %682 = vmatprep.subr.mxu0 0.0
        %683 = vmatpush2.msra.mxu0 0.0
        %684 = vmatprep.subr.mxu0 0.0
        %685 = vmatpush2.msra.mxu0 0.0
        %686 = vmatprep.subr.mxu0 0.0
        %687 = vmatpush2.msra.mxu0 0.0
        %688 = vmatprep.subr.mxu0 0.0
        %689 = vmatpush2.msra.mxu0 0.0
        %690 = vmatprep.subr.mxu0 0.0
        %691 = vmatpush2.msra.mxu0 0.0
        %692 = vmatprep.subr.mxu0 0.0
        %693 = vmatpush2.msra.mxu0 0.0
        %694 = vmatprep.subr.mxu0 0.0
        %695 = vmatpush2.msra.mxu0 0.0
        %696 = vmatprep.subr.mxu0 0.0
        %697 = vmatpush2.msra.mxu0 0.0
        %698 = vmatprep.subr.mxu0 0.0
        %699 = vmatpush2.msra.mxu0 0.0
        %700 = vmatprep.subr.mxu0 0.0
        %701 = vmatpush2.msra.mxu0 0.0
        %702 = vmatprep.subr.mxu0 0.0
        %703 = vmatpush2.msra.mxu0 0.0
        %704 = vmatprep.mubr.f32.mxu0 0.0
        %705 = vmatmul.mubr.f32.gmra.mxu0 %v329
        %v706 = vpop.f32.mrf.mxu0
        %v707 = vadd.f32 %v382, %v706
        %v708 = vpop.f32.mrf.mxu0
        %709 = vmatprep.mubr.f32.mxu0 0.0
        %710 = vmatmul.mubr.f32.gmra.mxu0 %v330
        %v711 = vpop.f32.mrf.mxu0
        %v712 = vadd.f32 %v382, %v711
        %v713 = vpop.f32.mrf.mxu0
        %714 = vmatprep.mubr.f32.mxu0 0.0
        %715 = vmatmul.mubr.f32.gmra.mxu0 %v331
        %v716 = vpop.f32.mrf.mxu0
        %v717 = vadd.f32 %v382, %v716
        %v718 = vpop.f32.mrf.mxu0
        %719 = vmatprep.mubr.f32.mxu0 0.0
        %720 = vmatmul.mubr.f32.gmra.mxu0 %v332
        %v721 = vpop.f32.mrf.mxu0
        %v722 = vadd.f32 %v382, %v721
        %v723 = vpop.f32.mrf.mxu0
        %724 = vmatprep.mubr.f32.mxu0 0.0
        %725 = vmatmul.mubr.f32.gmra.mxu0 %v333
        %v726 = vpop.f32.mrf.mxu0
        %v727 = vadd.f32 %v382, %v726
        %v728 = vpop.f32.mrf.mxu0
        %729 = vmatprep.mubr.f32.mxu0 0.0
        %730 = vmatmul.mubr.f32.gmra.mxu0 %v334
        %v731 = vpop.f32.mrf.mxu0
        %v732 = vadd.f32 %v382, %v731
        %v733 = vpop.f32.mrf.mxu0
        %734 = vmatprep.mubr.f32.mxu0 0.0
        %735 = vmatmul.mubr.f32.gmra.mxu0 %v335
        %v736 = vpop.f32.mrf.mxu0
        %v737 = vadd.f32 %v382, %v736
        %v738 = vpop.f32.mrf.mxu0
        %739 = vmatprep.mubr.f32.mxu0 0.0
        %740 = vmatmul.mubr.f32.gmra.mxu0 %v336
        %v741 = vpop.f32.mrf.mxu0
        %v742 = vadd.f32 %v382, %v741
        %v743 = vpop.f32.mrf.mxu0
        %744 = vmatprep.mubr.f32.mxu0 0.0
        %745 = vmatmul.mubr.f32.gmra.mxu0 %v337
        %v746 = vpop.f32.mrf.mxu0
        %v747 = vadd.f32 %v382, %v746
        %v748 = vpop.f32.mrf.mxu0
        %749 = vmatprep.mubr.f32.mxu0 0.0
        %750 = vmatmul.mubr.f32.gmra.mxu0 %v338
        %v751 = vpop.f32.mrf.mxu0
        %v752 = vadd.f32 %v382, %v751
        %v753 = vpop.f32.mrf.mxu0
        %754 = vmatprep.mubr.f32.mxu0 0.0
        %755 = vmatmul.mubr.f32.gmra.mxu0 %v339
        %v756 = vpop.f32.mrf.mxu0
        %v757 = vadd.f32 %v382, %v756
        %v758 = vpop.f32.mrf.mxu0
        %759 = vmatprep.mubr.f32.mxu0 0.0
        %760 = vmatmul.mubr.f32.gmra.mxu0 %v340
        %v761 = vpop.f32.mrf.mxu0
        %v762 = vadd.f32 %v382, %v761
        %v763 = vpop.f32.mrf.mxu0
        %764 = vmatprep.mubr.f32.mxu0 0.0
        %765 = vmatmul.mubr.f32.gmra.mxu0 %v341
        %v766 = vpop.f32.mrf.mxu0
        %v767 = vadd.f32 %v382, %v766
        %v768 = vpop.f32.mrf.mxu0
        %769 = vmatprep.mubr.f32.mxu0 0.0
        %770 = vmatmul.mubr.f32.gmra.mxu0 %v342
        %v771 = vpop.f32.mrf.mxu0
        %v772 = vadd.f32 %v382, %v771
        %v773 = vpop.f32.mrf.mxu0
        %774 = vmatprep.mubr.f32.mxu0 0.0
        %775 = vmatmul.mubr.f32.gmra.mxu0 %v343
        %v776 = vpop.f32.mrf.mxu0
        %v777 = vadd.f32 %v382, %v776
        %v778 = vpop.f32.mrf.mxu0
        %779 = vmatprep.mubr.f32.mxu0 0.0
        %780 = vmatmul.mubr.f32.gmra.mxu0 %v344
        %v781 = vpop.f32.mrf.mxu0
        %v782 = vadd.f32 %v382, %v781
        %v783 = vpop.f32.mrf.mxu0
        %784 = vmatprep.mubr.f32.mxu0 0.0
        %785 = vmatmul.mubr.f32.gmra.mxu0 %v345
        %v786 = vpop.f32.mrf.mxu0
        %v787 = vadd.f32 %v382, %v786
        %v788 = vpop.f32.mrf.mxu0
        %789 = vmatprep.mubr.f32.mxu0 0.0
        %790 = vmatmul.mubr.f32.gmra.mxu0 %v346
        %v791 = vpop.f32.mrf.mxu0
        %v792 = vadd.f32 %v382, %v791
        %v793 = vpop.f32.mrf.mxu0
        %794 = vmatprep.mubr.f32.mxu0 0.0
        %795 = vmatmul.mubr.f32.gmra.mxu0 %v347
        %v796 = vpop.f32.mrf.mxu0
        %v797 = vadd.f32 %v382, %v796
        %v798 = vpop.f32.mrf.mxu0
        %799 = vmatprep.mubr.f32.mxu0 0.0
        %800 = vmatmul.mubr.f32.gmra.mxu0 %v348
        %v801 = vpop.f32.mrf.mxu0
        %v802 = vadd.f32 %v382, %v801
        %v803 = vpop.f32.mrf.mxu0
        %804 = vmatprep.mubr.f32.mxu0 0.0
        %805 = vmatmul.mubr.f32.gmra.mxu0 %v349
        %v806 = vpop.f32.mrf.mxu0
        %v807 = vadd.f32 %v382, %v806
        %v808 = vpop.f32.mrf.mxu0
        %809 = vmatprep.mubr.f32.mxu0 0.0
        %810 = vmatmul.mubr.f32.gmra.mxu0 %v350
        %v811 = vpop.f32.mrf.mxu0
        %v812 = vadd.f32 %v382, %v811
        %v813 = vpop.f32.mrf.mxu0
        %814 = vmatprep.mubr.f32.mxu0 0.0
        %815 = vmatmul.mubr.f32.gmra.mxu0 %v351
        %v816 = vpop.f32.mrf.mxu0
        %v817 = vadd.f32 %v382, %v816
        %v818 = vpop.f32.mrf.mxu0
        %819 = vmatprep.mubr.f32.mxu0 0.0
        %820 = vmatmul.mubr.f32.gmra.mxu0 %v352
        %v821 = vpop.f32.mrf.mxu0
        %v822 = vadd.f32 %v382, %v821
        %v823 = vpop.f32.mrf.mxu0
        %824 = vmatprep.mubr.f32.mxu0 0.0
        %825 = vmatmul.mubr.f32.gmra.mxu0 %v353
        %v826 = vpop.f32.mrf.mxu0
        %v827 = vadd.f32 %v382, %v826
        %v828 = vpop.f32.mrf.mxu0
        %829 = vmatprep.mubr.f32.mxu0 0.0
        %830 = vmatmul.mubr.f32.gmra.mxu0 %v354
        %v831 = vpop.f32.mrf.mxu0
        %v832 = vadd.f32 %v382, %v831
        %v833 = vpop.f32.mrf.mxu0
        %834 = vmatprep.mubr.f32.mxu0 0.0
        %835 = vmatmul.mubr.f32.gmra.mxu0 %v355
        %v836 = vpop.f32.mrf.mxu0
        %v837 = vadd.f32 %v382, %v836
        %v838 = vpop.f32.mrf.mxu0
        %839 = vmatprep.mubr.f32.mxu0 0.0
        %840 = vmatmul.mubr.f32.gmra.mxu0 %v356
        %v841 = vpop.f32.mrf.mxu0
        %v842 = vadd.f32 %v382, %v841
        %v843 = vpop.f32.mrf.mxu0
        %844 = vmatprep.mubr.f32.mxu0 0.0
        %845 = vmatmul.mubr.f32.gmra.mxu0 %v357
        %v846 = vpop.f32.mrf.mxu0
        %v847 = vadd.f32 %v382, %v846
        %v848 = vpop.f32.mrf.mxu0
        %849 = vmatprep.mubr.f32.mxu0 0.0
        %850 = vmatmul.mubr.f32.gmra.mxu0 %v358
        %v851 = vpop.f32.mrf.mxu0
        %v852 = vadd.f32 %v382, %v851
        %v853 = vpop.f32.mrf.mxu0
        %854 = vmatprep.mubr.f32.mxu0 0.0
        %855 = vmatmul.mubr.f32.gmra.mxu0 %v359
        %v856 = vpop.f32.mrf.mxu0
        %v857 = vadd.f32 %v382, %v856
        %v858 = vpop.f32.mrf.mxu0
        %859 = vmatprep.mubr.f32.mxu0 0.0
        %860 = vmatmul.mubr.f32.gmra.mxu0 %v360
        %v861 = vpop.f32.mrf.mxu0
        %v862 = vadd.f32 %v382, %v861
        %v863 = vpop.f32.mrf.mxu0
        %864 = vdwg.mxu0
        %v865 = vtanh.pop %v707
        %v866 = vtanh.pop %v712
        %v867 = vtanh.pop %v717
        %v868 = vtanh.pop %v722
        %v869 = vtanh.pop %v727
        %v870 = vtanh.pop %v732
        %v871 = vtanh.pop %v737
        %v872 = vtanh.pop %v742
        %v873 = vtanh.pop %v747
        %v874 = vtanh.pop %v752
        %v875 = vtanh.pop %v757
        %v876 = vtanh.pop %v762
        %v877 = vtanh.pop %v767
        %v878 = vtanh.pop %v772
        %v879 = vtanh.pop %v777
        %v880 = vtanh.pop %v782
        %v881 = vtanh.pop %v787
        %v882 = vtanh.pop %v792
        %v883 = vtanh.pop %v797
        %v884 = vtanh.pop %v802
        %v885 = vtanh.pop %v807
        %v886 = vtanh.pop %v812
        %v887 = vtanh.pop %v817
        %v888 = vtanh.pop %v822
        %v889 = vtanh.pop %v827
        %v890 = vtanh.pop %v832
        %v891 = vtanh.pop %v837
        %v892 = vtanh.pop %v842
        %v893 = vtanh.pop %v847
        %v894 = vtanh.pop %v852
        %v895 = vtanh.pop %v857
        %v896 = vtanh.pop %v862
        %v897 = vlaneseq
        %v898 = vshrl.u32 %v897, 7
        %v899 = vsub.s32 0, %v898
        %v900 = vrot.slane %v378, %v899
        %v901 = vmul.f32 %v608, %v900
        %v902 = vmul.f32 %v609, %v900
        %v903 = vmul.f32 %v610, %v900
        %v904 = vmul.f32 %v611, %v900
        %v905 = vmul.f32 %v612, %v900
        %v906 = vmul.f32 %v613, %v900
        %v907 = vmul.f32 %v614, %v900
        %v908 = vmul.f32 %v615, %v900
        %v909 = vmul.f32 %v616, %v900
        %v910 = vmul.f32 %v617, %v900
        %v911 = vmul.f32 %v618, %v900
        %v912 = vmul.f32 %v619, %v900
        %v913 = vmul.f32 %v620, %v900
        %v914 = vmul.f32 %v621, %v900
        %v915 = vmul.f32 %v622, %v900
        %v916 = vmul.f32 %v623, %v900
        %v917 = vmul.f32 %v624, %v900
        %v918 = vmul.f32 %v625, %v900
        %v919 = vmul.f32 %v626, %v900
        %v920 = vmul.f32 %v627, %v900
        %v921 = vmul.f32 %v628, %v900
        %v922 = vmul.f32 %v629, %v900
        %v923 = vmul.f32 %v630, %v900
        %v924 = vmul.f32 %v631, %v900
        %v925 = vmul.f32 %v632, %v900
        %v926 = vmul.f32 %v633, %v900
        %v927 = vmul.f32 %v634, %v900
        %v928 = vmul.f32 %v635, %v900
        %v929 = vmul.f32 %v636, %v900
        %v930 = vmul.f32 %v637, %v900
        %v931 = vmul.f32 %v638, %v900
        %v932 = vmul.f32 %v639, %v900
        %933 = vadd.xlane.f32.xlu0 %v901
        %v934 = vpop.xlane.xlu0 %933
        %935 = vadd.xlane.f32.xlu0 %v902
        %v936 = vpop.xlane.xlu0 %935
        %937 = vadd.xlane.f32.xlu0 %v903
        %v938 = vpop.xlane.xlu0 %937
        %939 = vadd.xlane.f32.xlu0 %v904
        %v940 = vpop.xlane.xlu0 %939
        %941 = vadd.xlane.f32.xlu0 %v905
        %v942 = vpop.xlane.xlu0 %941
        %943 = vadd.xlane.f32.xlu0 %v906
        %v944 = vpop.xlane.xlu0 %943
        %945 = vadd.xlane.f32.xlu0 %v907
        %v946 = vpop.xlane.xlu0 %945
        %947 = vadd.xlane.f32.xlu0 %v908
        %v948 = vpop.xlane.xlu0 %947
        %949 = vadd.xlane.f32.xlu0 %v909
        %v950 = vpop.xlane.xlu0 %949
        %951 = vadd.xlane.f32.xlu0 %v910
        %v952 = vpop.xlane.xlu0 %951
        %953 = vadd.xlane.f32.xlu0 %v911
        %v954 = vpop.xlane.xlu0 %953
        %955 = vadd.xlane.f32.xlu0 %v912
        %v956 = vpop.xlane.xlu0 %955
        %957 = vadd.xlane.f32.xlu0 %v913
        %v958 = vpop.xlane.xlu0 %957
        %959 = vadd.xlane.f32.xlu0 %v914
        %v960 = vpop.xlane.xlu0 %959
        %961 = vadd.xlane.f32.xlu0 %v915
        %v962 = vpop.xlane.xlu0 %961
        %963 = vadd.xlane.f32.xlu0 %v916
        %v964 = vpop.xlane.xlu0 %963
        %965 = vadd.xlane.f32.xlu0 %v917
        %v966 = vpop.xlane.xlu0 %965
        %967 = vadd.xlane.f32.xlu0 %v918
        %v968 = vpop.xlane.xlu0 %967
        %969 = vadd.xlane.f32.xlu0 %v919
        %v970 = vpop.xlane.xlu0 %969
        %971 = vadd.xlane.f32.xlu0 %v920
        %v972 = vpop.xlane.xlu0 %971
        %973 = vadd.xlane.f32.xlu0 %v921
        %v974 = vpop.xlane.xlu0 %973
        %975 = vadd.xlane.f32.xlu0 %v922
        %v976 = vpop.xlane.xlu0 %975
        %977 = vadd.xlane.f32.xlu0 %v923
        %v978 = vpop.xlane.xlu0 %977
        %979 = vadd.xlane.f32.xlu0 %v924
        %v980 = vpop.xlane.xlu0 %979
        %981 = vadd.xlane.f32.xlu0 %v925
        %v982 = vpop.xlane.xlu0 %981
        %983 = vadd.xlane.f32.xlu0 %v926
        %v984 = vpop.xlane.xlu0 %983
        %985 = vadd.xlane.f32.xlu0 %v927
        %v986 = vpop.xlane.xlu0 %985
        %987 = vadd.xlane.f32.xlu0 %v928
        %v988 = vpop.xlane.xlu0 %987
        %989 = vadd.xlane.f32.xlu0 %v929
        %v990 = vpop.xlane.xlu0 %989
        %991 = vadd.xlane.f32.xlu0 %v930
        %v992 = vpop.xlane.xlu0 %991
        %993 = vadd.xlane.f32.xlu0 %v931
        %v994 = vpop.xlane.xlu0 %993
        %995 = vadd.xlane.f32.xlu0 %v932
        %v996 = vpop.xlane.xlu0 %995
        %v997 = vmul.f32 %v865, %v900
        %v998 = vmul.f32 %v866, %v900
        %v999 = vmul.f32 %v867, %v900
        %v1000 = vmul.f32 %v868, %v900
        %v1001 = vmul.f32 %v869, %v900
        %v1002 = vmul.f32 %v870, %v900
        %v1003 = vmul.f32 %v871, %v900
        %v1004 = vmul.f32 %v872, %v900
        %v1005 = vmul.f32 %v873, %v900
        %v1006 = vmul.f32 %v874, %v900
        %v1007 = vmul.f32 %v875, %v900
        %v1008 = vmul.f32 %v876, %v900
        %v1009 = vmul.f32 %v877, %v900
        %v1010 = vmul.f32 %v878, %v900
        %v1011 = vmul.f32 %v879, %v900
        %v1012 = vmul.f32 %v880, %v900
        %v1013 = vmul.f32 %v881, %v900
        %v1014 = vmul.f32 %v882, %v900
        %v1015 = vmul.f32 %v883, %v900
        %v1016 = vmul.f32 %v884, %v900
        %v1017 = vmul.f32 %v885, %v900
        %v1018 = vmul.f32 %v886, %v900
        %v1019 = vmul.f32 %v887, %v900
        %v1020 = vmul.f32 %v888, %v900
        %v1021 = vmul.f32 %v889, %v900
        %v1022 = vmul.f32 %v890, %v900
        %v1023 = vmul.f32 %v891, %v900
        %v1024 = vmul.f32 %v892, %v900
        %v1025 = vmul.f32 %v893, %v900
        %v1026 = vmul.f32 %v894, %v900
        %v1027 = vmul.f32 %v895, %v900
        %v1028 = vmul.f32 %v896, %v900
        %1029 = vadd.xlane.f32.xlu0 %v997
        %v1030 = vpop.xlane.xlu0 %1029
        %1031 = vadd.xlane.f32.xlu0 %v998
        %v1032 = vpop.xlane.xlu0 %1031
        %1033 = vadd.xlane.f32.xlu0 %v999
        %v1034 = vpop.xlane.xlu0 %1033
        %1035 = vadd.xlane.f32.xlu0 %v1000
        %v1036 = vpop.xlane.xlu0 %1035
        %1037 = vadd.xlane.f32.xlu0 %v1001
        %v1038 = vpop.xlane.xlu0 %1037
        %1039 = vadd.xlane.f32.xlu0 %v1002
        %v1040 = vpop.xlane.xlu0 %1039
        %1041 = vadd.xlane.f32.xlu0 %v1003
        %v1042 = vpop.xlane.xlu0 %1041
        %1043 = vadd.xlane.f32.xlu0 %v1004
        %v1044 = vpop.xlane.xlu0 %1043
        %1045 = vadd.xlane.f32.xlu0 %v1005
        %v1046 = vpop.xlane.xlu0 %1045
        %1047 = vadd.xlane.f32.xlu0 %v1006
        %v1048 = vpop.xlane.xlu0 %1047
        %1049 = vadd.xlane.f32.xlu0 %v1007
        %v1050 = vpop.xlane.xlu0 %1049
        %1051 = vadd.xlane.f32.xlu0 %v1008
        %v1052 = vpop.xlane.xlu0 %1051
        %1053 = vadd.xlane.f32.xlu0 %v1009
        %v1054 = vpop.xlane.xlu0 %1053
        %1055 = vadd.xlane.f32.xlu0 %v1010
        %v1056 = vpop.xlane.xlu0 %1055
        %1057 = vadd.xlane.f32.xlu0 %v1011
        %v1058 = vpop.xlane.xlu0 %1057
        %1059 = vadd.xlane.f32.xlu0 %v1012
        %v1060 = vpop.xlane.xlu0 %1059
        %1061 = vadd.xlane.f32.xlu0 %v1013
        %v1062 = vpop.xlane.xlu0 %1061
        %1063 = vadd.xlane.f32.xlu0 %v1014
        %v1064 = vpop.xlane.xlu0 %1063
        %1065 = vadd.xlane.f32.xlu0 %v1015
        %v1066 = vpop.xlane.xlu0 %1065
        %1067 = vadd.xlane.f32.xlu0 %v1016
        %v1068 = vpop.xlane.xlu0 %1067
        %1069 = vadd.xlane.f32.xlu0 %v1017
        %v1070 = vpop.xlane.xlu0 %1069
        %1071 = vadd.xlane.f32.xlu0 %v1018
        %v1072 = vpop.xlane.xlu0 %1071
        %1073 = vadd.xlane.f32.xlu0 %v1019
        %v1074 = vpop.xlane.xlu0 %1073
        %1075 = vadd.xlane.f32.xlu0 %v1020
        %v1076 = vpop.xlane.xlu0 %1075
        %1077 = vadd.xlane.f32.xlu0 %v1021
        %v1078 = vpop.xlane.xlu0 %1077
        %1079 = vadd.xlane.f32.xlu0 %v1022
        %v1080 = vpop.xlane.xlu0 %1079
        %1081 = vadd.xlane.f32.xlu0 %v1023
        %v1082 = vpop.xlane.xlu0 %1081
        %1083 = vadd.xlane.f32.xlu0 %v1024
        %v1084 = vpop.xlane.xlu0 %1083
        %1085 = vadd.xlane.f32.xlu0 %v1025
        %v1086 = vpop.xlane.xlu0 %1085
        %1087 = vadd.xlane.f32.xlu0 %v1026
        %v1088 = vpop.xlane.xlu0 %1087
        %1089 = vadd.xlane.f32.xlu0 %v1027
        %v1090 = vpop.xlane.xlu0 %1089
        %1091 = vadd.xlane.f32.xlu0 %v1028
        %v1092 = vpop.xlane.xlu0 %1091
        %v1093 = vsub.f32 %v934, %v1030
        %v1094 = vsub.f32 %v936, %v1032
        %v1095 = vsub.f32 %v938, %v1034
        %v1096 = vsub.f32 %v940, %v1036
        %v1097 = vsub.f32 %v942, %v1038
        %v1098 = vsub.f32 %v944, %v1040
        %v1099 = vsub.f32 %v946, %v1042
        %v1100 = vsub.f32 %v948, %v1044
        %v1101 = vsub.f32 %v950, %v1046
        %v1102 = vsub.f32 %v952, %v1048
        %v1103 = vsub.f32 %v954, %v1050
        %v1104 = vsub.f32 %v956, %v1052
        %v1105 = vsub.f32 %v958, %v1054
        %v1106 = vsub.f32 %v960, %v1056
        %v1107 = vsub.f32 %v962, %v1058
        %v1108 = vsub.f32 %v964, %v1060
        %v1109 = vsub.f32 %v966, %v1062
        %v1110 = vsub.f32 %v968, %v1064
        %v1111 = vsub.f32 %v970, %v1066
        %v1112 = vsub.f32 %v972, %v1068
        %v1113 = vsub.f32 %v974, %v1070
        %v1114 = vsub.f32 %v976, %v1072
        %v1115 = vsub.f32 %v978, %v1074
        %v1116 = vsub.f32 %v980, %v1076
        %v1117 = vsub.f32 %v982, %v1078
        %v1118 = vsub.f32 %v984, %v1080
        %v1119 = vsub.f32 %v986, %v1082
        %v1120 = vsub.f32 %v988, %v1084
        %v1121 = vsub.f32 %v990, %v1086
        %v1122 = vsub.f32 %v992, %v1088
        %v1123 = vsub.f32 %v994, %v1090
        %v1124 = vsub.f32 %v996, %v1092
        %v1125 = vand.u32 2147483647, %v1093
        %v1126 = vand.u32 2147483647, %v1094
        %v1127 = vand.u32 2147483647, %v1095
        %v1128 = vand.u32 2147483647, %v1096
        %v1129 = vand.u32 2147483647, %v1097
        %v1130 = vand.u32 2147483647, %v1098
        %v1131 = vand.u32 2147483647, %v1099
        %v1132 = vand.u32 2147483647, %v1100
        %v1133 = vand.u32 2147483647, %v1101
        %v1134 = vand.u32 2147483647, %v1102
        %v1135 = vand.u32 2147483647, %v1103
        %v1136 = vand.u32 2147483647, %v1104
        %v1137 = vand.u32 2147483647, %v1105
        %v1138 = vand.u32 2147483647, %v1106
        %v1139 = vand.u32 2147483647, %v1107
        %v1140 = vand.u32 2147483647, %v1108
        %v1141 = vand.u32 2147483647, %v1109
        %v1142 = vand.u32 2147483647, %v1110
        %v1143 = vand.u32 2147483647, %v1111
        %v1144 = vand.u32 2147483647, %v1112
        %v1145 = vand.u32 2147483647, %v1113
        %v1146 = vand.u32 2147483647, %v1114
        %v1147 = vand.u32 2147483647, %v1115
        %v1148 = vand.u32 2147483647, %v1116
        %v1149 = vand.u32 2147483647, %v1117
        %v1150 = vand.u32 2147483647, %v1118
        %v1151 = vand.u32 2147483647, %v1119
        %v1152 = vand.u32 2147483647, %v1120
        %v1153 = vand.u32 2147483647, %v1121
        %v1154 = vand.u32 2147483647, %v1122
        %v1155 = vand.u32 2147483647, %v1123
        %v1156 = vand.u32 2147483647, %v1124
        %v1157 = vsub.f32 0.0, %v1125
        %v1158 = vsub.f32 0.0, %v1126
        %v1159 = vsub.f32 0.0, %v1127
        %v1160 = vsub.f32 0.0, %v1128
        %v1161 = vsub.f32 0.0, %v1129
        %v1162 = vsub.f32 0.0, %v1130
        %v1163 = vsub.f32 0.0, %v1131
        %v1164 = vsub.f32 0.0, %v1132
        %v1165 = vsub.f32 0.0, %v1133
        %v1166 = vsub.f32 0.0, %v1134
        %v1167 = vsub.f32 0.0, %v1135
        %v1168 = vsub.f32 0.0, %v1136
        %v1169 = vsub.f32 0.0, %v1137
        %v1170 = vsub.f32 0.0, %v1138
        %v1171 = vsub.f32 0.0, %v1139
        %v1172 = vsub.f32 0.0, %v1140
        %v1173 = vsub.f32 0.0, %v1141
        %v1174 = vsub.f32 0.0, %v1142
        %v1175 = vsub.f32 0.0, %v1143
        %v1176 = vsub.f32 0.0, %v1144
        %v1177 = vsub.f32 0.0, %v1145
        %v1178 = vsub.f32 0.0, %v1146
        %v1179 = vsub.f32 0.0, %v1147
        %v1180 = vsub.f32 0.0, %v1148
        %v1181 = vsub.f32 0.0, %v1149
        %v1182 = vsub.f32 0.0, %v1150
        %v1183 = vsub.f32 0.0, %v1151
        %v1184 = vsub.f32 0.0, %v1152
        %v1185 = vsub.f32 0.0, %v1153
        %v1186 = vsub.f32 0.0, %v1154
        %v1187 = vsub.f32 0.0, %v1155
        %v1188 = vsub.f32 0.0, %v1156
        %v1189 = vmul.f32 %v1157, 1.442695
        %v1190 = vpow.pop %v1189
        %v1191 = vmul.f32 %v1158, 1.442695
        %v1192 = vpow.pop %v1191
        %v1193 = vmul.f32 %v1159, 1.442695
        %v1194 = vpow.pop %v1193
        %v1195 = vmul.f32 %v1160, 1.442695
        %v1196 = vpow.pop %v1195
        %v1197 = vmul.f32 %v1161, 1.442695
        %v1198 = vpow.pop %v1197
        %v1199 = vmul.f32 %v1162, 1.442695
        %v1200 = vpow.pop %v1199
        %v1201 = vmul.f32 %v1163, 1.442695
        %v1202 = vpow.pop %v1201
        %v1203 = vmul.f32 %v1164, 1.442695
        %v1204 = vpow.pop %v1203
        %v1205 = vmul.f32 %v1165, 1.442695
        %v1206 = vpow.pop %v1205
        %v1207 = vmul.f32 %v1166, 1.442695
        %v1208 = vpow.pop %v1207
        %v1209 = vmul.f32 %v1167, 1.442695
        %v1210 = vpow.pop %v1209
        %v1211 = vmul.f32 %v1168, 1.442695
        %v1212 = vpow.pop %v1211
        %v1213 = vmul.f32 %v1169, 1.442695
        %v1214 = vpow.pop %v1213
        %v1215 = vmul.f32 %v1170, 1.442695
        %v1216 = vpow.pop %v1215
        %v1217 = vmul.f32 %v1171, 1.442695
        %v1218 = vpow.pop %v1217
        %v1219 = vmul.f32 %v1172, 1.442695
        %v1220 = vpow.pop %v1219
        %v1221 = vmul.f32 %v1173, 1.442695
        %v1222 = vpow.pop %v1221
        %v1223 = vmul.f32 %v1174, 1.442695
        %v1224 = vpow.pop %v1223
        %v1225 = vmul.f32 %v1175, 1.442695
        %v1226 = vpow.pop %v1225
        %v1227 = vmul.f32 %v1176, 1.442695
        %v1228 = vpow.pop %v1227
        %v1229 = vmul.f32 %v1177, 1.442695
        %v1230 = vpow.pop %v1229
        %v1231 = vmul.f32 %v1178, 1.442695
        %v1232 = vpow.pop %v1231
        %v1233 = vmul.f32 %v1179, 1.442695
        %v1234 = vpow.pop %v1233
        %v1235 = vmul.f32 %v1180, 1.442695
        %v1236 = vpow.pop %v1235
        %v1237 = vmul.f32 %v1181, 1.442695
        %v1238 = vpow.pop %v1237
        %v1239 = vmul.f32 %v1182, 1.442695
        %v1240 = vpow.pop %v1239
        %v1241 = vmul.f32 %v1183, 1.442695
        %v1242 = vpow.pop %v1241
        %v1243 = vmul.f32 %v1184, 1.442695
        %v1244 = vpow.pop %v1243
        %v1245 = vmul.f32 %v1185, 1.442695
        %v1246 = vpow.pop %v1245
        %v1247 = vmul.f32 %v1186, 1.442695
        %v1248 = vpow.pop %v1247
        %v1249 = vmul.f32 %v1187, 1.442695
        %v1250 = vpow.pop %v1249
        %v1251 = vmul.f32 %v1188, 1.442695
        %v1252 = vpow.pop %v1251
        %v1253 = vadd.f32 %v1190, 1.0
        %v1254 = vadd.f32 %v1192, 1.0
        %v1255 = vadd.f32 %v1194, 1.0
        %v1256 = vadd.f32 %v1196, 1.0
        %v1257 = vadd.f32 %v1198, 1.0
        %v1258 = vadd.f32 %v1200, 1.0
        %v1259 = vadd.f32 %v1202, 1.0
        %v1260 = vadd.f32 %v1204, 1.0
        %v1261 = vadd.f32 %v1206, 1.0
        %v1262 = vadd.f32 %v1208, 1.0
        %v1263 = vadd.f32 %v1210, 1.0
        %v1264 = vadd.f32 %v1212, 1.0
        %v1265 = vadd.f32 %v1214, 1.0
        %v1266 = vadd.f32 %v1216, 1.0
        %v1267 = vadd.f32 %v1218, 1.0
        %v1268 = vadd.f32 %v1220, 1.0
        %v1269 = vadd.f32 %v1222, 1.0
        %v1270 = vadd.f32 %v1224, 1.0
        %v1271 = vadd.f32 %v1226, 1.0
        %v1272 = vadd.f32 %v1228, 1.0
        %v1273 = vadd.f32 %v1230, 1.0
        %v1274 = vadd.f32 %v1232, 1.0
        %v1275 = vadd.f32 %v1234, 1.0
        %v1276 = vadd.f32 %v1236, 1.0
        %v1277 = vadd.f32 %v1238, 1.0
        %v1278 = vadd.f32 %v1240, 1.0
        %v1279 = vadd.f32 %v1242, 1.0
        %v1280 = vadd.f32 %v1244, 1.0
        %v1281 = vadd.f32 %v1246, 1.0
        %v1282 = vadd.f32 %v1248, 1.0
        %v1283 = vadd.f32 %v1250, 1.0
        %v1284 = vadd.f32 %v1252, 1.0
        %v1285 = vrcp.pop %v1253
        %v1286 = vrcp.pop %v1254
        %v1287 = vrcp.pop %v1255
        %v1288 = vrcp.pop %v1256
        %v1289 = vrcp.pop %v1257
        %v1290 = vrcp.pop %v1258
        %v1291 = vrcp.pop %v1259
        %v1292 = vrcp.pop %v1260
        %v1293 = vrcp.pop %v1261
        %v1294 = vrcp.pop %v1262
        %v1295 = vrcp.pop %v1263
        %v1296 = vrcp.pop %v1264
        %v1297 = vrcp.pop %v1265
        %v1298 = vrcp.pop %v1266
        %v1299 = vrcp.pop %v1267
        %v1300 = vrcp.pop %v1268
        %v1301 = vrcp.pop %v1269
        %v1302 = vrcp.pop %v1270
        %v1303 = vrcp.pop %v1271
        %v1304 = vrcp.pop %v1272
        %v1305 = vrcp.pop %v1273
        %v1306 = vrcp.pop %v1274
        %v1307 = vrcp.pop %v1275
        %v1308 = vrcp.pop %v1276
        %v1309 = vrcp.pop %v1277
        %v1310 = vrcp.pop %v1278
        %v1311 = vrcp.pop %v1279
        %v1312 = vrcp.pop %v1280
        %v1313 = vrcp.pop %v1281
        %v1314 = vrcp.pop %v1282
        %v1315 = vrcp.pop %v1283
        %v1316 = vrcp.pop %v1284
        %vm1317 = vcmp.ge.f32.partialorder %v1093, 0.0
        %vm1318 = vcmp.ge.f32.partialorder %v1094, 0.0
        %vm1319 = vcmp.ge.f32.partialorder %v1095, 0.0
        %vm1320 = vcmp.ge.f32.partialorder %v1096, 0.0
        %vm1321 = vcmp.ge.f32.partialorder %v1097, 0.0
        %vm1322 = vcmp.ge.f32.partialorder %v1098, 0.0
        %vm1323 = vcmp.ge.f32.partialorder %v1099, 0.0
        %vm1324 = vcmp.ge.f32.partialorder %v1100, 0.0
        %vm1325 = vcmp.ge.f32.partialorder %v1101, 0.0
        %vm1326 = vcmp.ge.f32.partialorder %v1102, 0.0
        %vm1327 = vcmp.ge.f32.partialorder %v1103, 0.0
        %vm1328 = vcmp.ge.f32.partialorder %v1104, 0.0
        %vm1329 = vcmp.ge.f32.partialorder %v1105, 0.0
        %vm1330 = vcmp.ge.f32.partialorder %v1106, 0.0
        %vm1331 = vcmp.ge.f32.partialorder %v1107, 0.0
        %vm1332 = vcmp.ge.f32.partialorder %v1108, 0.0
        %vm1333 = vcmp.ge.f32.partialorder %v1109, 0.0
        %vm1334 = vcmp.ge.f32.partialorder %v1110, 0.0
        %vm1335 = vcmp.ge.f32.partialorder %v1111, 0.0
        %vm1336 = vcmp.ge.f32.partialorder %v1112, 0.0
        %vm1337 = vcmp.ge.f32.partialorder %v1113, 0.0
        %vm1338 = vcmp.ge.f32.partialorder %v1114, 0.0
        %vm1339 = vcmp.ge.f32.partialorder %v1115, 0.0
        %vm1340 = vcmp.ge.f32.partialorder %v1116, 0.0
        %vm1341 = vcmp.ge.f32.partialorder %v1117, 0.0
        %vm1342 = vcmp.ge.f32.partialorder %v1118, 0.0
        %vm1343 = vcmp.ge.f32.partialorder %v1119, 0.0
        %vm1344 = vcmp.ge.f32.partialorder %v1120, 0.0
        %vm1345 = vcmp.ge.f32.partialorder %v1121, 0.0
        %vm1346 = vcmp.ge.f32.partialorder %v1122, 0.0
        %vm1347 = vcmp.ge.f32.partialorder %v1123, 0.0
        %vm1348 = vcmp.ge.f32.partialorder %v1124, 0.0
        %v1349 = vmul.f32 %v1190, %v1285
        %v1350 = vmul.f32 %v1192, %v1286
        %v1351 = vmul.f32 %v1194, %v1287
        %v1352 = vmul.f32 %v1196, %v1288
        %v1353 = vmul.f32 %v1198, %v1289
        %v1354 = vmul.f32 %v1200, %v1290
        %v1355 = vmul.f32 %v1202, %v1291
        %v1356 = vmul.f32 %v1204, %v1292
        %v1357 = vmul.f32 %v1206, %v1293
        %v1358 = vmul.f32 %v1208, %v1294
        %v1359 = vmul.f32 %v1210, %v1295
        %v1360 = vmul.f32 %v1212, %v1296
        %v1361 = vmul.f32 %v1214, %v1297
        %v1362 = vmul.f32 %v1216, %v1298
        %v1363 = vmul.f32 %v1218, %v1299
        %v1364 = vmul.f32 %v1220, %v1300
        %v1365 = vmul.f32 %v1222, %v1301
        %v1366 = vmul.f32 %v1224, %v1302
        %v1367 = vmul.f32 %v1226, %v1303
        %v1368 = vmul.f32 %v1228, %v1304
        %v1369 = vmul.f32 %v1230, %v1305
        %v1370 = vmul.f32 %v1232, %v1306
        %v1371 = vmul.f32 %v1234, %v1307
        %v1372 = vmul.f32 %v1236, %v1308
        %v1373 = vmul.f32 %v1238, %v1309
        %v1374 = vmul.f32 %v1240, %v1310
        %v1375 = vmul.f32 %v1242, %v1311
        %v1376 = vmul.f32 %v1244, %v1312
        %v1377 = vmul.f32 %v1246, %v1313
        %v1378 = vmul.f32 %v1248, %v1314
        %v1379 = vmul.f32 %v1250, %v1315
        %v1380 = vmul.f32 %v1252, %v1316
        %v1381 = vsel %vm1317, %v1285, %v1349
        %v1382 = vsel %vm1318, %v1286, %v1350
        %v1383 = vsel %vm1319, %v1287, %v1351
        %v1384 = vsel %vm1320, %v1288, %v1352
        %v1385 = vsel %vm1321, %v1289, %v1353
        %v1386 = vsel %vm1322, %v1290, %v1354
        %v1387 = vsel %vm1323, %v1291, %v1355
        %v1388 = vsel %vm1324, %v1292, %v1356
        %v1389 = vsel %vm1325, %v1293, %v1357
        %v1390 = vsel %vm1326, %v1294, %v1358
        %v1391 = vsel %vm1327, %v1295, %v1359
        %v1392 = vsel %vm1328, %v1296, %v1360
        %v1393 = vsel %vm1329, %v1297, %v1361
        %v1394 = vsel %vm1330, %v1298, %v1362
        %v1395 = vsel %vm1331, %v1299, %v1363
        %v1396 = vsel %vm1332, %v1300, %v1364
        %v1397 = vsel %vm1333, %v1301, %v1365
        %v1398 = vsel %vm1334, %v1302, %v1366
        %v1399 = vsel %vm1335, %v1303, %v1367
        %v1400 = vsel %vm1336, %v1304, %v1368
        %v1401 = vsel %vm1337, %v1305, %v1369
        %v1402 = vsel %vm1338, %v1306, %v1370
        %v1403 = vsel %vm1339, %v1307, %v1371
        %v1404 = vsel %vm1340, %v1308, %v1372
        %v1405 = vsel %vm1341, %v1309, %v1373
        %v1406 = vsel %vm1342, %v1310, %v1374
        %v1407 = vsel %vm1343, %v1311, %v1375
        %v1408 = vsel %vm1344, %v1312, %v1376
        %v1409 = vsel %vm1345, %v1313, %v1377
        %v1410 = vsel %vm1346, %v1314, %v1378
        %v1411 = vsel %vm1347, %v1315, %v1379
        %v1412 = vsel %vm1348, %v1316, %v1380
        %v1413 = vsub.f32 %v297, %v329
        %v1414 = vsub.f32 %v298, %v330
        %v1415 = vsub.f32 %v299, %v331
        %v1416 = vsub.f32 %v300, %v332
        %v1417 = vsub.f32 %v301, %v333
        %v1418 = vsub.f32 %v302, %v334
        %v1419 = vsub.f32 %v303, %v335
        %v1420 = vsub.f32 %v304, %v336
        %v1421 = vsub.f32 %v305, %v337
        %v1422 = vsub.f32 %v306, %v338
        %v1423 = vsub.f32 %v307, %v339
        %v1424 = vsub.f32 %v308, %v340
        %v1425 = vsub.f32 %v309, %v341
        %v1426 = vsub.f32 %v310, %v342
        %v1427 = vsub.f32 %v311, %v343
        %v1428 = vsub.f32 %v312, %v344
        %v1429 = vsub.f32 %v313, %v345
        %v1430 = vsub.f32 %v314, %v346
        %v1431 = vsub.f32 %v315, %v347
        %v1432 = vsub.f32 %v316, %v348
        %v1433 = vsub.f32 %v317, %v349
        %v1434 = vsub.f32 %v318, %v350
        %v1435 = vsub.f32 %v319, %v351
        %v1436 = vsub.f32 %v320, %v352
        %v1437 = vsub.f32 %v321, %v353
        %v1438 = vsub.f32 %v322, %v354
        %v1439 = vsub.f32 %v323, %v355
        %v1440 = vsub.f32 %v324, %v356
        %v1441 = vsub.f32 %v325, %v357
        %v1442 = vsub.f32 %v326, %v358
        %v1443 = vsub.f32 %v327, %v359
        %v1444 = vsub.f32 %v328, %v360
        %v1445 = vmul.f32 %v1381, %v1413
        %v1446 = vmul.f32 %v1382, %v1414
        %v1447 = vmul.f32 %v1383, %v1415
        %v1448 = vmul.f32 %v1384, %v1416
        %v1449 = vmul.f32 %v1385, %v1417
        %v1450 = vmul.f32 %v1386, %v1418
        %v1451 = vmul.f32 %v1387, %v1419
        %v1452 = vmul.f32 %v1388, %v1420
        %v1453 = vmul.f32 %v1389, %v1421
        %v1454 = vmul.f32 %v1390, %v1422
        %v1455 = vmul.f32 %v1391, %v1423
        %v1456 = vmul.f32 %v1392, %v1424
        %v1457 = vmul.f32 %v1393, %v1425
        %v1458 = vmul.f32 %v1394, %v1426
        %v1459 = vmul.f32 %v1395, %v1427
        %v1460 = vmul.f32 %v1396, %v1428
        %v1461 = vmul.f32 %v1397, %v1429
        %v1462 = vmul.f32 %v1398, %v1430
        %v1463 = vmul.f32 %v1399, %v1431
        %v1464 = vmul.f32 %v1400, %v1432
        %v1465 = vmul.f32 %v1401, %v1433
        %v1466 = vmul.f32 %v1402, %v1434
        %v1467 = vmul.f32 %v1403, %v1435
        %v1468 = vmul.f32 %v1404, %v1436
        %v1469 = vmul.f32 %v1405, %v1437
        %v1470 = vmul.f32 %v1406, %v1438
        %v1471 = vmul.f32 %v1407, %v1439
        %v1472 = vmul.f32 %v1408, %v1440
        %v1473 = vmul.f32 %v1409, %v1441
        %v1474 = vmul.f32 %v1410, %v1442
        %v1475 = vmul.f32 %v1411, %v1443
        %v1476 = vmul.f32 %v1412, %v1444
        %v1477 = vadd.f32 %v329, %v1445
        %v1478 = vadd.f32 %v330, %v1446
        %v1479 = vadd.f32 %v331, %v1447
        %v1480 = vadd.f32 %v332, %v1448
        %v1481 = vadd.f32 %v333, %v1449
        %v1482 = vadd.f32 %v334, %v1450
        %v1483 = vadd.f32 %v335, %v1451
        %v1484 = vadd.f32 %v336, %v1452
        %v1485 = vadd.f32 %v337, %v1453
        %v1486 = vadd.f32 %v338, %v1454
        %v1487 = vadd.f32 %v339, %v1455
        %v1488 = vadd.f32 %v340, %v1456
        %v1489 = vadd.f32 %v341, %v1457
        %v1490 = vadd.f32 %v342, %v1458
        %v1491 = vadd.f32 %v343, %v1459
        %v1492 = vadd.f32 %v344, %v1460
        %v1493 = vadd.f32 %v345, %v1461
        %v1494 = vadd.f32 %v346, %v1462
        %v1495 = vadd.f32 %v347, %v1463
        %v1496 = vadd.f32 %v348, %v1464
        %v1497 = vadd.f32 %v349, %v1465
        %v1498 = vadd.f32 %v350, %v1466
        %v1499 = vadd.f32 %v351, %v1467
        %v1500 = vadd.f32 %v352, %v1468
        %v1501 = vadd.f32 %v353, %v1469
        %v1502 = vadd.f32 %v354, %v1470
        %v1503 = vadd.f32 %v355, %v1471
        %v1504 = vadd.f32 %v356, %v1472
        %v1505 = vadd.f32 %v357, %v1473
        %v1506 = vadd.f32 %v358, %v1474
        %v1507 = vadd.f32 %v359, %v1475
        %v1508 = vadd.f32 %v360, %v1476
        %1509 = vst [vmem:[%s281] sm:$0xff] %v1477
        %1510 = vst [vmem:[%s281 + $0x8] sm:$0xff] %v1478
        %1511 = vst [vmem:[%s281 + $0x10] sm:$0xff] %v1479
        %1512 = vst [vmem:[%s281 + $0x18] sm:$0xff] %v1480
        %1513 = vst [vmem:[%s281 + $0x20] sm:$0xff] %v1481
        %1514 = vst [vmem:[%s281 + $0x28] sm:$0xff] %v1482
        %1515 = vst [vmem:[%s281 + $0x30] sm:$0xff] %v1483
        %1516 = vst [vmem:[%s281 + $0x38] sm:$0xff] %v1484
        %1517 = vst [vmem:[%s281 + $0x40] sm:$0xff] %v1485
        %1518 = vst [vmem:[%s281 + $0x48] sm:$0xff] %v1486
        %1519 = vst [vmem:[%s281 + $0x50] sm:$0xff] %v1487
        %1520 = vst [vmem:[%s281 + $0x58] sm:$0xff] %v1488
        %1521 = vst [vmem:[%s281 + $0x60] sm:$0xff] %v1489
        %1522 = vst [vmem:[%s281 + $0x68] sm:$0xff] %v1490
        %1523 = vst [vmem:[%s281 + $0x70] sm:$0xff] %v1491
        %1524 = vst [vmem:[%s281 + $0x78] sm:$0xff] %v1492
        %1525 = vst [vmem:[%s281 + $0x80] sm:$0xff] %v1493
        %1526 = vst [vmem:[%s281 + $0x88] sm:$0xff] %v1494
        %1527 = vst [vmem:[%s281 + $0x90] sm:$0xff] %v1495
        %1528 = vst [vmem:[%s281 + $0x98] sm:$0xff] %v1496
        %1529 = vst [vmem:[%s281 + $0xa0] sm:$0xff] %v1497
        %1530 = vst [vmem:[%s281 + $0xa8] sm:$0xff] %v1498
        %1531 = vst [vmem:[%s281 + $0xb0] sm:$0xff] %v1499
        %1532 = vst [vmem:[%s281 + $0xb8] sm:$0xff] %v1500
        %1533 = vst [vmem:[%s281 + $0xc0] sm:$0xff] %v1501
        %1534 = vst [vmem:[%s281 + $0xc8] sm:$0xff] %v1502
        %1535 = vst [vmem:[%s281 + $0xd0] sm:$0xff] %v1503
        %1536 = vst [vmem:[%s281 + $0xd8] sm:$0xff] %v1504
        %1537 = vst [vmem:[%s281 + $0xe0] sm:$0xff] %v1505
        %1538 = vst [vmem:[%s281 + $0xe8] sm:$0xff] %v1506
        %1539 = vst [vmem:[%s281 + $0xf0] sm:$0xff] %v1507
        %1540 = vst [vmem:[%s281 + $0xf8] sm:$0xff] %v1508
        %s1541 = sand.u32 %s126, 1
        %s1542 = scalar_lea.sflag [#allocation4], %s1541
        %s1543 = sand.u32 %s126, 1
        %s1544 = smul.addr %s1543, 256
        %s1545 = scalar_lea.vmem [#allocation8], %s1544
        // Predicated region
        $region49: #{tpu_custom_call.1} parent=35 // pred_check
          %p1546 = pneg %p136
        $region50: #{tpu_custom_call.1} parent=35 // pred_check_branch
          %1548 = sbr.rel (%p1546) target = $region52
        $region51: #{tpu_custom_call.1} parent=35 // pred_region
          %s1549 = smul.u32 32, %s24
          %s1550 = ssub.s32 125, %s1549
          %p1551 = scmp.lt.s32.totalorder %s1550, 32
          %s1552 = scalar_select %p1551, %s1550, 32
          %s1553 = smul.u32 128, %s1552
          %s1555 = ssub.s32 4096, %s1553
          %1556 = vsyncadd %s1542, %s1555
          %p1557 = scmp.ne.s32.totalorder 0, %s1553
          %s1558 = smul.addr %s1549, 128
          %s1559 = scalar_lea.hbm %s4, %s1558
          %s1560 = smul.u32 8, %s1552
          %s1561 = sshll.u32 %s1545, 4
          %s1562 = int_to_ptr.vmem [resolvable:$true] %s1561
          %s1563 = sshll.u32 %s1560, 4
          %1567 = dma.vmem_to_hbm [thread:$0]  (%p1557), %s1562, %s1563, %s1559, %s1542, 128, 128, 8
        $region52: #{tpu_custom_call.1} parent=35 // pred_fallthru
          _
      $region36: #{tpu_custom_call.1} parent=5 // pred_fallthru
        _
      %p1568 = scmp.le.s32.totalorder 2, %s19
      // Predicated region
      $region53: #{tpu_custom_call.1} parent=5 // pred_check
        %p1569 = pneg %p1568
      $region54: #{tpu_custom_call.1} parent=5 // pred_check_branch
        %1571 = sbr.rel (%p1569) target = $region56
      $region55: #{tpu_custom_call.1} parent=5 // pred_region
        %s1572 = ssub.s32 %s19, 2
        // Predicated region
        $region57: #{tpu_custom_call.1} parent=55 // pred_check
          %p1573 = pneg %p142
        $region58: #{tpu_custom_call.1} parent=55 // pred_check_branch
          %1575 = sbr.rel (%p1573) target = $region60
        $region59: #{tpu_custom_call.1} parent=55 // pred_region
          %s1576 = sand.u32 %s127, 1
          %s1577 = scalar_lea.sflag [#allocation4], %s1576
          %s1578 = sand.u32 %s127, 1
          %s1579 = smul.addr %s1578, 256
          %s1580 = scalar_lea.vmem [#allocation8], %s1579
          %1581 = dma.done %s1577, 4096
        $region60: #{tpu_custom_call.1} parent=55 // pred_fallthru
          _
      $region56: #{tpu_custom_call.1} parent=5 // pred_fallthru
        _
    $region6: #{tpu_custom_call.1} parent=1 // loop_footer
      %s23 = sadd.s32 1, %s19
    $region7: #{tpu_custom_call.1} parent=1 // loop_footer_branch
      %18 = sbr.rel target = $region3
    $region8: #{tpu_custom_call.1} parent=1 // loop_exit
      _
    %1582 = vsyncpa [#allocation3], 1
    %s1583 = scalar_lea.sflag [#allocation3], 1
    %1584 = vsyncpa %s1583, 1
    %1585 = vsyncpa [#allocation6], 1
    %s1586 = scalar_lea.sflag [#allocation6], 1
    %1587 = vsyncpa %s1586, 1
    %1588 = vsyncpa [#allocation4], 1
    %s1589 = scalar_lea.sflag [#allocation4], 1
    %1590 = vsyncpa %s1589, 1

</llo_original>
